<compile_context>
chip_gen: v7x
topology: tpu7x:2x2x1
jax: 0.10.0
libtpu: 0.0.40
codegen_flags: <defaults>
</compile_context>

<pallas_src>
import functools

import jax
import jax.numpy as jnp
from jax.experimental import pallas as pl
from jax.experimental.pallas import tpu as pltpu

LN_EPS = 1e-5            # nn.LayerNorm default
ROW_TILE = 2048          # patch rows per grid step (multiple of 256)
VMEM_BUDGET = 24 << 20   # conservative per-step budget (v7x scoped default 32 MiB)


def _cdiv(a, b):
    return (a + b - 1) // b


def _round_up(x, m):
    return ((x + m - 1) // m) * m


def _patch_embed_kernel(x_ref, w_ref, b_ref, g_ref, beta_ref, o_ref):
    # x_ref: (tn, K) bf16   w_ref: (K, E) bf16
    # b/g/beta: (1, E) f32  o_ref: (tn, E) out dtype
    h = jnp.dot(x_ref[...], w_ref[...], preferred_element_type=jnp.float32)
    h = h + b_ref[...]                                    # conv bias (f32)
    # Two-pass LayerNorm stats over E (avoids E[h^2]-mean^2 cancellation).
    mean = jnp.mean(h, axis=-1, keepdims=True)
    cent = h - mean
    var = jnp.mean(cent * cent, axis=-1, keepdims=True)
    normed = cent * jax.lax.rsqrt(var + LN_EPS)
    o_ref[...] = (normed * g_ref[...] + beta_ref[...]).astype(o_ref.dtype)


def _pick_row_tile(n_tot, k, e, out_bytes):
    """Big row tile; keep >=2 grid steps when possible; stay VMEM-safe."""
    if n_tot <= 512:
        tn = n_tot                                        # one full block
    elif n_tot < 2 * ROW_TILE:
        tn = max(256, _round_up(_cdiv(n_tot, 2), 8))      # 2 steps for v7x megacore
    else:
        tn = ROW_TILE

    def vmem_bytes(t):
        return (2 * t * k * 2            # streamed X tiles (bf16, double buffered)
                + 2 * t * e * out_bytes  # output tiles (double buffered)
                + 2 * k * e * 2          # resident projection weight
                + 2 * t * e * 4)         # f32 matmul / LN intermediates

    while tn > 256 and vmem_bytes(tn) > VMEM_BUDGET:
        tn = max(256, _round_up(tn // 2, 8))
    return tn, vmem_bytes(tn)


@functools.partial(jax.jit, static_argnames=("patch_size",))
def patch_embed(x, conv_w, conv_b, ln_g, ln_b, *, patch_size):
    """x: (B, C, T, H, W); conv_w: (E, C, 1, p, p); conv_b/ln_g/ln_b: (E,)."""
    B, C, T, H, W = x.shape
    p = patch_size
    E = conv_w.shape[0]
    Hp, Wp = H // p, W // p
    K = C * p * p
    N_tot = B * T * Hp * Wp

    # --- glue: im2col patch extraction (order matches PyTorch conv + flatten(2)).
    # Cast to bf16 FIRST so this single fused convert+transpose pass moves
    # 2-byte elements; no pad passes follow.
    xb = x.astype(jnp.bfloat16)
    xp = xb.reshape(B, C, T, Hp, p, Wp, p)
    xp = jnp.transpose(xp, (0, 2, 3, 5, 1, 4, 6)).reshape(N_tot, K)

    # conv weight (E, C, 1, p, p) -> (K, E); inner (C, p, p) order matches xp.
    w2d = jnp.transpose(conv_w.reshape(E, K), (1, 0)).astype(jnp.bfloat16)
    b2d = conv_b.reshape(1, E).astype(jnp.float32)
    g2d = ln_g.reshape(1, E).astype(jnp.float32)
    beta2d = ln_b.reshape(1, E).astype(jnp.float32)

    out_dtype = x.dtype
    tn, vmem_est = _pick_row_tile(N_tot, K, E, jnp.dtype(out_dtype).itemsize)
    grid_steps = _cdiv(N_tot, tn)
    vmem_limit = int(min(max(32 << 20, 2 * vmem_est), 56 << 20))

    y = pl.pallas_call(
        _patch_embed_kernel,
        out_shape=jax.ShapeDtypeStruct((N_tot, E), out_dtype),
        grid_spec=pltpu.PrefetchScalarGridSpec(
            num_scalar_prefetch=0,
            grid=(grid_steps,),
            in_specs=[
                pl.BlockSpec((tn, K), lambda i: (i, 0)),   # streaming patch rows
                pl.BlockSpec((K, E), lambda i: (0, 0)),    # resident projection W
                pl.BlockSpec((1, E), lambda i: (0, 0)),    # conv bias
                pl.BlockSpec((1, E), lambda i: (0, 0)),    # LN gamma
                pl.BlockSpec((1, E), lambda i: (0, 0)),    # LN beta
            ],
            out_specs=pl.BlockSpec((tn, E), lambda i: (i, 0)),
        ),
        compiler_params=pltpu.CompilerParams(
            dimension_semantics=("parallel",),             # row axis shards across TCs (v7x)
            vmem_limit_bytes=vmem_limit),
    )(xp, w2d, b2d, g2d, beta2d)

    # --- glue: back to the PyTorch output layout (B, E, T, Hp, Wp).
    y = y.reshape(B, T, Hp, Wp, E)
    return jnp.transpose(y, (0, 4, 1, 2, 3))


def reference(x, conv_w, conv_b, ln_g, ln_b, patch_size, cast_bf16=False):
    """Pure-JAX reference of the PyTorch forward (for self-check)."""
    B, C, T, H, W = x.shape
    p = patch_size
    E = conv_w.shape[0]
    Hp, Wp = H // p, W // p
    xp = x.reshape(B, C, T, Hp, p, Wp, p)
    xp = jnp.transpose(xp, (0, 2, 3, 5, 1, 4, 6)).reshape(B, T * Hp * Wp, C * p * p)
    w = conv_w.reshape(E, -1).T
    if cast_bf16:
        xp = xp.astype(jnp.bfloat16)
        w = w.astype(jnp.bfloat16)
    h = jnp.dot(xp, w, preferred_element_type=jnp.float32) + conv_b  # (B, N, E)
    mean = h.mean(-1, keepdims=True)
    var = ((h - mean) ** 2).mean(-1, keepdims=True)
    h = (h - mean) / jnp.sqrt(var + LN_EPS) * ln_g + ln_b
    return jnp.transpose(h.reshape(B, T, Hp, Wp, E), (0, 4, 1, 2, 3)).astype(x.dtype)


if __name__ == "__main__":
    # Small video-shaped input (B, C, T, H, W) consistent with the module.
    # N_tot = 2*3*15*15 = 1350, K = 3*4*4 = 48 (kept unpadded).
    # Row tile = 680 -> grid of 2 steps (second step is a masked partial block).
    B, C, T, H, W = 2, 3, 3, 60, 60
    patch = 4
    embed_dim = 128

    key = jax.random.PRNGKey(0)
    k1, k2, k3 = jax.random.split(key, 3)
    x = jax.random.normal(k1, (B, C, T, H, W), dtype=jnp.float32)
    conv_w = jax.random.normal(k2, (embed_dim, C, 1, patch, patch),
                               dtype=jnp.float32) * 0.02
    conv_b = jax.random.normal(k3, (embed_dim,), dtype=jnp.float32) * 0.02
    ln_g = jnp.ones((embed_dim,), dtype=jnp.float32)    # nn.LayerNorm init
    ln_b = jnp.zeros((embed_dim,), dtype=jnp.float32)

    out = patch_embed(x, conv_w, conv_b, ln_g, ln_b, patch_size=patch)
    out = jax.block_until_ready(out)

    assert out.shape == (B, embed_dim, T, H // patch, W // patch), out.shape

    # Tight check vs a bf16-operand reference (same rounding as the kernel),
    # loose check vs the pure-f32 reference (bf16 operand rounding only).
    ref_bf16 = reference(x, conv_w, conv_b, ln_g, ln_b, patch, cast_bf16=True)
    ref_f32 = reference(x, conv_w, conv_b, ln_g, ln_b, patch, cast_bf16=False)
    assert jnp.allclose(out, ref_bf16, atol=5e-3, rtol=5e-3), "mismatch vs bf16 reference"
    assert jnp.allclose(out, ref_f32, atol=5e-2, rtol=5e-2), "mismatch vs f32 reference"
    print("KERNEL_OK")
</pallas_src>

<mosaic_0001>
module attributes {stable_mosaic.version = 11 : i64} {
  func.func @_patch_embed_kernel(%arg0: i32, %arg1: memref<680x48xbf16, #tpu.memory_space<vmem>>, %arg2: memref<48x128xbf16, #tpu.memory_space<vmem>>, %arg3: memref<1x128xf32, #tpu.memory_space<vmem>>, %arg4: memref<1x128xf32, #tpu.memory_space<vmem>>, %arg5: memref<1x128xf32, #tpu.memory_space<vmem>>, %arg6: memref<680x128xf32, #tpu.memory_space<vmem>>) attributes {dimension_semantics = [#tpu.dimension_semantics<parallel>], iteration_bounds = array<i64: 2>, scalar_prefetch = 0 : i64, scratch_operands = 0 : i64, tpu.core_type = #tpu.core_type<tc>, window_params = [{transform_indices = @transform_0, window_bounds = array<i64: 680, 48>}, {pipeline_mode = #tpu.pipeline_mode<synchronous>, transform_indices = @transform_1, window_bounds = array<i64: 48, 128>}, {pipeline_mode = #tpu.pipeline_mode<synchronous>, transform_indices = @transform_2, window_bounds = array<i64: 1, 128>}, {pipeline_mode = #tpu.pipeline_mode<synchronous>, transform_indices = @transform_3, window_bounds = array<i64: 1, 128>}, {pipeline_mode = #tpu.pipeline_mode<synchronous>, transform_indices = @transform_4, window_bounds = array<i64: 1, 128>}, {transform_indices = @transform_5, window_bounds = array<i64: 680, 128>}]} {
    %c0 = arith.constant 0 : index
    %c0_0 = arith.constant 0 : index
    %0 = vector.load %arg1[%c0, %c0_0] : memref<680x48xbf16, #tpu.memory_space<vmem>>, vector<680x48xbf16>
    %c0_1 = arith.constant 0 : index
    %c0_2 = arith.constant 0 : index
    %1 = vector.load %arg2[%c0_1, %c0_2] : memref<48x128xbf16, #tpu.memory_space<vmem>>, vector<48x128xbf16>
    %cst = arith.constant dense<0.000000e+00> : vector<680x128xf32>
    %2 = tpu.matmul %0, %1, %cst {dimension_numbers = #tpu.dot_dimension_numbers<[1], [0], [0], [1], [0, 0, 1, 1], [], []>} : vector<680x48xbf16>, vector<48x128xbf16>, vector<680x128xf32> -> vector<680x128xf32>
    %c0_3 = arith.constant 0 : index
    %c0_4 = arith.constant 0 : index
    %3 = vector.load %arg3[%c0_3, %c0_4] : memref<1x128xf32, #tpu.memory_space<vmem>>, vector<1x128xf32>
    %4 = vector.broadcast %3 : vector<1x128xf32> to vector<680x128xf32>
    %5 = arith.addf %2, %4 : vector<680x128xf32>
    %cst_5 = arith.constant dense<0.000000e+00> : vector<680xf32>
    %6 = vector.multi_reduction <add>, %5, %cst_5 [1] : vector<680x128xf32> to vector<680xf32>
    %7 = vector.shape_cast %6 : vector<680xf32> to vector<680x1xf32>
    %cst_6 = arith.constant 1.280000e+02 : f32
    %8 = vector.broadcast %cst_6 : f32 to vector<680x1xf32>
    %9 = arith.divf %7, %8 : vector<680x1xf32>
    %10 = vector.broadcast %9 : vector<680x1xf32> to vector<680x128xf32>
    %11 = arith.subf %5, %10 : vector<680x128xf32>
    %12 = arith.mulf %11, %11 : vector<680x128xf32>
    %cst_7 = arith.constant dense<0.000000e+00> : vector<680xf32>
    %13 = vector.multi_reduction <add>, %12, %cst_7 [1] : vector<680x128xf32> to vector<680xf32>
    %14 = vector.shape_cast %13 : vector<680xf32> to vector<680x1xf32>
    %cst_8 = arith.constant 1.280000e+02 : f32
    %15 = vector.broadcast %cst_8 : f32 to vector<680x1xf32>
    %16 = arith.divf %14, %15 : vector<680x1xf32>
    %cst_9 = arith.constant 9.99999974E-6 : f32
    %17 = vector.broadcast %cst_9 : f32 to vector<680x1xf32>
    %18 = arith.addf %16, %17 : vector<680x1xf32>
    %19 = math.rsqrt %18 : vector<680x1xf32>
    %20 = vector.broadcast %19 : vector<680x1xf32> to vector<680x128xf32>
    %21 = arith.mulf %11, %20 : vector<680x128xf32>
    %c0_10 = arith.constant 0 : index
    %c0_11 = arith.constant 0 : index
    %22 = vector.load %arg4[%c0_10, %c0_11] : memref<1x128xf32, #tpu.memory_space<vmem>>, vector<1x128xf32>
    %23 = vector.broadcast %22 : vector<1x128xf32> to vector<680x128xf32>
    %24 = arith.mulf %21, %23 : vector<680x128xf32>
    %c0_12 = arith.constant 0 : index
    %c0_13 = arith.constant 0 : index
    %25 = vector.load %arg5[%c0_12, %c0_13] : memref<1x128xf32, #tpu.memory_space<vmem>>, vector<1x128xf32>
    %26 = vector.broadcast %25 : vector<1x128xf32> to vector<680x128xf32>
    %27 = arith.addf %24, %26 : vector<680x128xf32>
    %c0_14 = arith.constant 0 : index
    %c0_15 = arith.constant 0 : index
    %28 = vector.load %arg6[%c0_14, %c0_15] : memref<680x128xf32, #tpu.memory_space<vmem>>, vector<680x128xf32>
    tpu.vector_store %arg6[%c0_14, %c0_15], %27 {strides = array<i32>} : memref<680x128xf32, #tpu.memory_space<vmem>>, vector<680x128xf32>,
    return
  }
  func.func @transform_0(%arg0: i32) -> (i32, i32) {
    %c0_i32 = arith.constant 0 : i32
    %c0_i32_0 = arith.constant 0 : i32
    return %arg0, %c0_i32 : i32, i32
  }
  func.func @transform_1(%arg0: i32) -> (i32, i32) {
    %c0_i32 = arith.constant 0 : i32
    %c0_i32_0 = arith.constant 0 : i32
    %c0_i32_1 = arith.constant 0 : i32
    return %c0_i32, %c0_i32_0 : i32, i32
  }
  func.func @transform_2(%arg0: i32) -> (i32, i32) {
    %c0_i32 = arith.constant 0 : i32
    %c0_i32_0 = arith.constant 0 : i32
    %c0_i32_1 = arith.constant 0 : i32
    return %c0_i32, %c0_i32_0 : i32, i32
  }
  func.func @transform_3(%arg0: i32) -> (i32, i32) {
    %c0_i32 = arith.constant 0 : i32
    %c0_i32_0 = arith.constant 0 : i32
    %c0_i32_1 = arith.constant 0 : i32
    return %c0_i32, %c0_i32_0 : i32, i32
  }
  func.func @transform_4(%arg0: i32) -> (i32, i32) {
    %c0_i32 = arith.constant 0 : i32
    %c0_i32_0 = arith.constant 0 : i32
    %c0_i32_1 = arith.constant 0 : i32
    return %c0_i32, %c0_i32_0 : i32, i32
  }
  func.func @transform_5(%arg0: i32) -> (i32, i32) {
    %c0_i32 = arith.constant 0 : i32
    %c0_i32_0 = arith.constant 0 : i32
    return %arg0, %c0_i32 : i32, i32
  }
}

</mosaic_0001>

<llo_original>
// kernel: patch_embed.1
$region0: #{patch_embed.1}
  #allocation0 [shape = 'u32[]', space=smem, size = 0x4, offset = 0x4, fixed_abs, tag = 'smem constant byte address 0x4 - core index']
  #allocation1 [shape = 'u32[144,128]{1,0:T(1,128)}', space=vmem, size = 0x12000, scoped, tag = 'internal scratch']
  %s0 = inlined_call_operand.vmem [shape: bf16[1350,48], index: 0, kind: input, shape index: {}]
  %s1 = inlined_call_operand.vmem [shape: bf16[48,128], index: 1, kind: input, shape index: {}]
  %s2 = inlined_call_operand.vmem [shape: f32[1,128], index: 2, kind: input, shape index: {}]
  %s3 = inlined_call_operand.vmem [shape: f32[1,128], index: 3, kind: input, shape index: {}]
  %s4 = inlined_call_operand.vmem [shape: f32[1,128], index: 4, kind: input, shape index: {}]
  %s5 = inlined_call_operand.vmem [shape: f32[1350,128], index: 5, kind: output, shape index: {}]
  %s6 = sld [smem:[#allocation0]]
  $region101: #{patch_embed.1} parent=0
    _
  %s8 = ssub.s32 1, %s6
  %s9 = scalar_select 0, %s8, %s6
  $region1: #{patch_embed.1} parent=0
    #allocation2 [shape = 'u8[696320]{0}', space=vmem, size = 0xaa000, scoped, tag = 'output window, operand 0']
    loop: start=0, step=1, limit=4
    $region2: #{patch_embed.1} parent=1 // loop_pre_header
      _
    $region3: #{patch_embed.1} parent=1 // loop_header
      %s11 = sphi 0, %s15
      %p12 = scmp.ge.s32.totalorder %s11, 4
      %s21 = sphi 0, %s23
      %s24 = sphi 0, %s21
      %s25 = sphi 0, %s24
      %s41 = sphi 0, %s25
      %s45 = sphi 0, %s45
      %s47 = sphi 0, %s45
      %s48 = sphi 0, %s47
      %s62 = sphi 0, %s48
      %s66 = sphi 0, %s66
      %s68 = sphi 0, %s66
      %s69 = sphi 0, %s68
      %s83 = sphi 0, %s69
      %s87 = sphi 0, %s87
      %s89 = sphi 0, %s87
      %s90 = sphi 0, %s89
      %s104 = sphi 0, %s90
      %s108 = sphi 0, %s108
      %s110 = sphi 0, %s108
      %s111 = sphi 0, %s110
      %s125 = sphi 0, %s111
      %s131 = sphi 0, %s133
      %s134 = sphi 0, %s131
      %s135 = sphi 0, %s134
      %s151 = sphi 0, %s135
    $region4: #{patch_embed.1} parent=1 // loop_header_branch
      %14 = sbr.rel (%p12) target = $region8
    $region5: #{patch_embed.1} parent=1 // loop_body
      %s16 = ssub.s32 %s11, 1
      %s17 = ssub.s32 %s11, 2
      %s18 = sadd.s32 %s11, 1
      %s19 = ssub.s32 %s11, %s18
      %p20 = scmp.eq.s32.totalorder %s19, 0
      %s22 = sadd.s32 %s21, 1
      %s23 = scalar_select %p20, %s21, %s22
      %p26 = pneg %p20
      %p27 = scmp.eq.s32.totalorder %s11, 1
      %p28 = por %p26, %p27
      %p29 = scmp.ne.s32.totalorder %s21, %s24
      %p30 = scmp.eq.s32.totalorder %s11, 0
      %p31 = por %p29, %p30
      %p32 = scmp.ne.s32.totalorder %s21, %s24
      %p33 = scmp.eq.s32.totalorder %s16, 1
      %p34 = por %p32, %p33
      %p35 = scmp.ne.s32.totalorder %s24, %s25
      %p36 = scmp.eq.s32.totalorder %s16, 0
      %p37 = por %p35, %p36
      %p38 = scmp.ne.s32.totalorder %s24, %s25
      %p39 = scmp.eq.s32.totalorder %s17, 1
      %p40 = por %p38, %p39
      %p42 = scmp.ne.s32.totalorder %s25, %s41
      %p43 = scmp.eq.s32.totalorder %s17, 0
      %p44 = por %p42, %p43
      %s46 = sadd.s32 %s45, 1
      %p49 = scmp.eq.s32.totalorder %s11, 1
      %p50 = scmp.ne.s32.totalorder %s45, %s47
      %p51 = scmp.eq.s32.totalorder %s11, 0
      %p52 = por %p50, %p51
      %p53 = scmp.ne.s32.totalorder %s45, %s47
      %p54 = scmp.eq.s32.totalorder %s16, 1
      %p55 = por %p53, %p54
      %p56 = scmp.ne.s32.totalorder %s47, %s48
      %p57 = scmp.eq.s32.totalorder %s16, 0
      %p58 = por %p56, %p57
      %p59 = scmp.ne.s32.totalorder %s47, %s48
      %p60 = scmp.eq.s32.totalorder %s17, 1
      %p61 = por %p59, %p60
      %p63 = scmp.ne.s32.totalorder %s48, %s62
      %p64 = scmp.eq.s32.totalorder %s17, 0
      %p65 = por %p63, %p64
      %s67 = sadd.s32 %s66, 1
      %p70 = scmp.eq.s32.totalorder %s11, 1
      %p71 = scmp.ne.s32.totalorder %s66, %s68
      %p72 = scmp.eq.s32.totalorder %s11, 0
      %p73 = por %p71, %p72
      %p74 = scmp.ne.s32.totalorder %s66, %s68
      %p75 = scmp.eq.s32.totalorder %s16, 1
      %p76 = por %p74, %p75
      %p77 = scmp.ne.s32.totalorder %s68, %s69
      %p78 = scmp.eq.s32.totalorder %s16, 0
      %p79 = por %p77, %p78
      %p80 = scmp.ne.s32.totalorder %s68, %s69
      %p81 = scmp.eq.s32.totalorder %s17, 1
      %p82 = por %p80, %p81
      %p84 = scmp.ne.s32.totalorder %s69, %s83
      %p85 = scmp.eq.s32.totalorder %s17, 0
      %p86 = por %p84, %p85
      %s88 = sadd.s32 %s87, 1
      %p91 = scmp.eq.s32.totalorder %s11, 1
      %p92 = scmp.ne.s32.totalorder %s87, %s89
      %p93 = scmp.eq.s32.totalorder %s11, 0
      %p94 = por %p92, %p93
      %p95 = scmp.ne.s32.totalorder %s87, %s89
      %p96 = scmp.eq.s32.totalorder %s16, 1
      %p97 = por %p95, %p96
      %p98 = scmp.ne.s32.totalorder %s89, %s90
      %p99 = scmp.eq.s32.totalorder %s16, 0
      %p100 = por %p98, %p99
      %p101 = scmp.ne.s32.totalorder %s89, %s90
      %p102 = scmp.eq.s32.totalorder %s17, 1
      %p103 = por %p101, %p102
      %p105 = scmp.ne.s32.totalorder %s90, %s104
      %p106 = scmp.eq.s32.totalorder %s17, 0
      %p107 = por %p105, %p106
      %s109 = sadd.s32 %s108, 1
      %p112 = scmp.eq.s32.totalorder %s11, 1
      %p113 = scmp.ne.s32.totalorder %s108, %s110
      %p114 = scmp.eq.s32.totalorder %s11, 0
      %p115 = por %p113, %p114
      %p116 = scmp.ne.s32.totalorder %s108, %s110
      %p117 = scmp.eq.s32.totalorder %s16, 1
      %p118 = por %p116, %p117
      %p119 = scmp.ne.s32.totalorder %s110, %s111
      %p120 = scmp.eq.s32.totalorder %s16, 0
      %p121 = por %p119, %p120
      %p122 = scmp.ne.s32.totalorder %s110, %s111
      %p123 = scmp.eq.s32.totalorder %s17, 1
      %p124 = por %p122, %p123
      %p126 = scmp.ne.s32.totalorder %s111, %s125
      %p127 = scmp.eq.s32.totalorder %s17, 0
      %p128 = por %p126, %p127
      %s129 = ssub.s32 %s11, %s18
      %p130 = scmp.eq.s32.totalorder %s129, 0
      %s132 = sadd.s32 %s131, 1
      %s133 = scalar_select %p130, %s131, %s132
      %p136 = pneg %p130
      %p137 = scmp.eq.s32.totalorder %s11, 1
      %p138 = por %p136, %p137
      %p139 = scmp.ne.s32.totalorder %s131, %s134
      %p140 = scmp.eq.s32.totalorder %s11, 0
      %p141 = por %p139, %p140
      %p142 = scmp.ne.s32.totalorder %s131, %s134
      %p143 = scmp.eq.s32.totalorder %s16, 1
      %p144 = por %p142, %p143
      %p145 = scmp.ne.s32.totalorder %s134, %s135
      %p146 = scmp.eq.s32.totalorder %s16, 0
      %p147 = por %p145, %p146
      %p148 = scmp.ne.s32.totalorder %s134, %s135
      %p149 = scmp.eq.s32.totalorder %s17, 1
      %p150 = por %p148, %p149
      %p152 = scmp.ne.s32.totalorder %s135, %s151
      %p153 = scmp.eq.s32.totalorder %s17, 0
      %p154 = por %p152, %p153
      %p155 = scmp.le.s32.totalorder 1, %s11
      %p156 = scmp.lt.s32.totalorder %s11, 3
      %p157 = pnand %p155, %p156
      %p158 = pneg %p157
      // Predicated region
      $region9: #{patch_embed.1} parent=5 // pred_check
        _
      $region10: #{patch_embed.1} parent=5 // pred_check_branch
        %160 = sbr.rel (%p157) target = $region12
      $region11: #{patch_embed.1} parent=5 // pred_region
        %s161 = ssub.s32 %s11, 1
        // Predicated region
        $region13: #{patch_embed.1} parent=11 // pred_check
          %p162 = pneg %p58
        $region14: #{patch_embed.1} parent=11 // pred_check_branch
          %164 = sbr.rel (%p162) target = $region16
        $region15: #{patch_embed.1} parent=11 // pred_region
          _
        $region16: #{patch_embed.1} parent=11 // pred_fallthru
          _
        // Predicated region
        $region17: #{patch_embed.1} parent=11 // pred_check
          %p165 = pneg %p79
        $region18: #{patch_embed.1} parent=11 // pred_check_branch
          %167 = sbr.rel (%p165) target = $region20
        $region19: #{patch_embed.1} parent=11 // pred_region
          _
        $region20: #{patch_embed.1} parent=11 // pred_fallthru
          _
        // Predicated region
        $region21: #{patch_embed.1} parent=11 // pred_check
          %p168 = pneg %p100
        $region22: #{patch_embed.1} parent=11 // pred_check_branch
          %170 = sbr.rel (%p168) target = $region24
        $region23: #{patch_embed.1} parent=11 // pred_region
          _
        $region24: #{patch_embed.1} parent=11 // pred_fallthru
          _
        // Predicated region
        $region25: #{patch_embed.1} parent=11 // pred_check
          %p171 = pneg %p121
        $region26: #{patch_embed.1} parent=11 // pred_check_branch
          %173 = sbr.rel (%p171) target = $region28
        $region27: #{patch_embed.1} parent=11 // pred_region
          _
        $region28: #{patch_embed.1} parent=11 // pred_fallthru
          _
      $region12: #{patch_embed.1} parent=5 // pred_fallthru
        _
      %p174 = scmp.lt.s32.totalorder %s11, 2
      // Predicated region
      $region29: #{patch_embed.1} parent=5 // pred_check
        %p175 = pneg %p174
      $region30: #{patch_embed.1} parent=5 // pred_check_branch
        %177 = sbr.rel (%p175) target = $region32
      $region31: #{patch_embed.1} parent=5 // pred_region
        // Predicated region
        $region33: #{patch_embed.1} parent=31 // pred_check
          %p178 = pneg %p31
        $region34: #{patch_embed.1} parent=31 // pred_check_branch
          %180 = sbr.rel (%p178) target = $region36
        $region35: #{patch_embed.1} parent=31 // pred_region
          %s181 = smul.u32 85, %s11
          %s182 = ssub.s32 169, %s181
          %p183 = scmp.lt.s32.totalorder %s182, 85
          %s184 = scalar_select %p183, %s182, 85
          %s185 = smul.u32 64, %s184
          %p186 = scmp.lt.s32.totalorder %s181, 168
          %s187 = scalar_select %p186, %s181, 168
          %s188 = smul.addr %s187, 4
          %s189 = scalar_lea.vmem %s0, %s188
          %s190 = smul.u32 85, %s11
          %s191 = ssub.s32 169, %s190
          %p192 = scmp.lt.s32.totalorder %s191, 85
          %s193 = scalar_select %p192, %s191, 85
          %s194 = smul.u32 64, %s193
        $region36: #{patch_embed.1} parent=31 // pred_fallthru
          _
      $region32: #{patch_embed.1} parent=5 // pred_fallthru
        _
      %p195 = scmp.le.s32.totalorder 1, %s11
      %p196 = scmp.lt.s32.totalorder %s11, 3
      %p197 = pnand %p195, %p196
      %p198 = pneg %p197
      // Predicated region
      $region37: #{patch_embed.1} parent=5 // pred_check
        _
      $region38: #{patch_embed.1} parent=5 // pred_check_branch
        %200 = sbr.rel (%p197) target = $region40
      $region39: #{patch_embed.1} parent=5 // pred_region
        %s201 = ssub.s32 %s11, 1
        %s202 = smul.u32 85, %s16
        %s203 = ssub.s32 169, %s202
        %p204 = scmp.lt.s32.totalorder %s203, 85
        %s205 = scalar_select %p204, %s203, 85
        %s206 = smul.u32 64, %s205
        %p207 = scmp.lt.s32.totalorder %s202, 168
        %s208 = scalar_select %p207, %s202, 168
        %s209 = smul.addr %s208, 4
        %s210 = scalar_lea.vmem %s0, %s209
        %p211 = pneg %p37
        %p212 = pneg %p34
        %p213 = pneg %p58
        %p214 = pneg %p55
        %p215 = pneg %p79
        %p216 = pneg %p76
        %p217 = pneg %p100
        %p218 = pneg %p97
        %p219 = pneg %p121
        %p220 = pneg %p118
        %p221 = pneg %p147
        %p222 = pneg %p144
        %s223 = sand.u32 %s134, 1
        %s224 = sand.u32 %s134, 1
        %s225 = smul.addr %s224, 680
        %s226 = scalar_lea.vmem [#allocation2], %s225
        %s227 = smul.u32 85, %s16
        %s228 = ssub.s32 169, %s227
        %p229 = scmp.lt.s32.totalorder %s228, 85
        %s230 = scalar_select %p229, %s228, 85
        %s231 = smul.u32 64, %s230
        %p232 = scmp.lt.s32.totalorder %s227, 168
        %s233 = scalar_select %p232, %s227, 168
        %s234 = smul.addr %s233, 4
        %s235 = scalar_lea.vmem %s0, %s234
        %s236 = smul.u32 85, %s16
        %s237 = ssub.s32 169, %s236
        %p238 = scmp.lt.s32.totalorder %s237, 85
        %s239 = scalar_select %p238, %s237, 85
        %s240 = smul.u32 64, %s239
        %s241 = smul.u32 85, %s16
        %s242 = ssub.s32 169, %s241
        %p243 = scmp.lt.s32.totalorder %s242, 85
        %s244 = scalar_select %p243, %s242, 85
        %s245 = smul.u32 128, %s244
        %v247 = vld [vmem:[%s235] sm:$0xf]
        %v248 = vld [vmem:[%s235 + $0x4] sm:$0xf]
        %v249 = vld [vmem:[%s235 + $0x8] sm:$0xf]
        %v250 = vld [vmem:[%s235 + $0xc] sm:$0xf]
        %v251 = vld [vmem:[%s235 + $0x10] sm:$0xf]
        %v252 = vld [vmem:[%s235 + $0x14] sm:$0xf]
        %v253 = vld [vmem:[%s235 + $0x18] sm:$0xf]
        %v254 = vld [vmem:[%s235 + $0x1c] sm:$0xf]
        %v255 = vld [vmem:[%s235 + $0x20] sm:$0xf]
        %v256 = vld [vmem:[%s235 + $0x24] sm:$0xf]
        %v257 = vld [vmem:[%s235 + $0x28] sm:$0xf]
        %v258 = vld [vmem:[%s235 + $0x2c] sm:$0xf]
        %v259 = vld [vmem:[%s235 + $0x30] sm:$0xf]
        %v260 = vld [vmem:[%s235 + $0x34] sm:$0xf]
        %v261 = vld [vmem:[%s235 + $0x38] sm:$0xf]
        %v262 = vld [vmem:[%s235 + $0x3c] sm:$0xf]
        %v263 = vld [vmem:[%s235 + $0x40] sm:$0xf]
        %v264 = vld [vmem:[%s235 + $0x44] sm:$0xf]
        %v265 = vld [vmem:[%s235 + $0x48] sm:$0xf]
        %v266 = vld [vmem:[%s235 + $0x4c] sm:$0xf]
        %v267 = vld [vmem:[%s235 + $0x50] sm:$0xf]
        %v268 = vld [vmem:[%s235 + $0x54] sm:$0xf]
        %v269 = vld [vmem:[%s235 + $0x58] sm:$0xf]
        %v270 = vld [vmem:[%s235 + $0x5c] sm:$0xf]
        %v271 = vld [vmem:[%s235 + $0x60] sm:$0xf]
        %v272 = vld [vmem:[%s235 + $0x64] sm:$0xf]
        %v273 = vld [vmem:[%s235 + $0x68] sm:$0xf]
        %v274 = vld [vmem:[%s235 + $0x6c] sm:$0xf]
        %v275 = vld [vmem:[%s235 + $0x70] sm:$0xf]
        %v276 = vld [vmem:[%s235 + $0x74] sm:$0xf]
        %v277 = vld [vmem:[%s235 + $0x78] sm:$0xf]
        %v278 = vld [vmem:[%s235 + $0x7c] sm:$0xf]
        %v279 = vld [vmem:[%s235 + $0x80] sm:$0xf]
        %v280 = vld [vmem:[%s235 + $0x84] sm:$0xf]
        %v281 = vld [vmem:[%s235 + $0x88] sm:$0xf]
        %v282 = vld [vmem:[%s235 + $0x8c] sm:$0xf]
        %v283 = vld [vmem:[%s235 + $0x90] sm:$0xf]
        %v284 = vld [vmem:[%s235 + $0x94] sm:$0xf]
        %v285 = vld [vmem:[%s235 + $0x98] sm:$0xf]
        %v286 = vld [vmem:[%s235 + $0x9c] sm:$0xf]
        %v287 = vld [vmem:[%s235 + $0xa0] sm:$0xf]
        %v288 = vld [vmem:[%s235 + $0xa4] sm:$0xf]
        %v289 = vld [vmem:[%s235 + $0xa8] sm:$0xf]
        %v290 = vld [vmem:[%s235 + $0xac] sm:$0xf]
        %v291 = vld [vmem:[%s235 + $0xb0] sm:$0xf]
        %v292 = vld [vmem:[%s235 + $0xb4] sm:$0xf]
        %v293 = vld [vmem:[%s235 + $0xb8] sm:$0xf]
        %v294 = vld [vmem:[%s235 + $0xbc] sm:$0xf]
        %v295 = vld [vmem:[%s235 + $0xc0] sm:$0xf]
        %v296 = vld [vmem:[%s235 + $0xc4] sm:$0xf]
        %v297 = vld [vmem:[%s235 + $0xc8] sm:$0xf]
        %v298 = vld [vmem:[%s235 + $0xcc] sm:$0xf]
        %v299 = vld [vmem:[%s235 + $0xd0] sm:$0xf]
        %v300 = vld [vmem:[%s235 + $0xd4] sm:$0xf]
        %v301 = vld [vmem:[%s235 + $0xd8] sm:$0xf]
        %v302 = vld [vmem:[%s235 + $0xdc] sm:$0xf]
        %v303 = vld [vmem:[%s235 + $0xe0] sm:$0xf]
        %v304 = vld [vmem:[%s235 + $0xe4] sm:$0xf]
        %v305 = vld [vmem:[%s235 + $0xe8] sm:$0xf]
        %v306 = vld [vmem:[%s235 + $0xec] sm:$0xf]
        %v307 = vld [vmem:[%s235 + $0xf0] sm:$0xf]
        %v308 = vld [vmem:[%s235 + $0xf4] sm:$0xf]
        %v309 = vld [vmem:[%s235 + $0xf8] sm:$0xf]
        %v310 = vld [vmem:[%s235 + $0xfc] sm:$0xf]
        %v311 = vld [vmem:[%s235 + $0x100] sm:$0xf]
        %v312 = vld [vmem:[%s235 + $0x104] sm:$0xf]
        %v313 = vld [vmem:[%s235 + $0x108] sm:$0xf]
        %v314 = vld [vmem:[%s235 + $0x10c] sm:$0xf]
        %v315 = vld [vmem:[%s235 + $0x110] sm:$0xf]
        %v316 = vld [vmem:[%s235 + $0x114] sm:$0xf]
        %v317 = vld [vmem:[%s235 + $0x118] sm:$0xf]
        %v318 = vld [vmem:[%s235 + $0x11c] sm:$0xf]
        %v319 = vld [vmem:[%s235 + $0x120] sm:$0xf]
        %v320 = vld [vmem:[%s235 + $0x124] sm:$0xf]
        %v321 = vld [vmem:[%s235 + $0x128] sm:$0xf]
        %v322 = vld [vmem:[%s235 + $0x12c] sm:$0xf]
        %v323 = vld [vmem:[%s235 + $0x130] sm:$0xf]
        %v324 = vld [vmem:[%s235 + $0x134] sm:$0xf]
        %v325 = vld [vmem:[%s235 + $0x138] sm:$0xf]
        %v326 = vld [vmem:[%s235 + $0x13c] sm:$0xf]
        %v327 = vld [vmem:[%s235 + $0x140] sm:$0xf]
        %v328 = vld [vmem:[%s235 + $0x144] sm:$0xf]
        %v329 = vld [vmem:[%s235 + $0x148] sm:$0xf]
        %v330 = vld [vmem:[%s235 + $0x14c] sm:$0xf]
        %v331 = vld [vmem:[%s235 + $0x150] sm:$0xf]
        %v332 = vld [vmem:[%s1] sm:$0xf]
        %v333 = vld [vmem:[%s1 + $0x4] sm:$0xf]
        %v334 = vld [vmem:[%s1 + $0x8] sm:$0xf]
        %v335 = vld [vmem:[%s1 + $0xc] sm:$0xf]
        %v336 = vld [vmem:[%s1 + $0x10] sm:$0xf]
        %v337 = vld [vmem:[%s1 + $0x14] sm:$0xf]
        %v338 = vld [vmem:[%s2] sm:$0x1]
        %v340 = vlaneseq
        %v341 = vshrl.u32 %v340, 7
        %v342 = vsub.s32 0, %v341
        %v343 = vrot.slane %v338, %v342
        %v430 = vunpack.c.l.b16 %v247
        %v431 = vunpack.c.l.b16 %v248
        %v432 = vunpack.c.l.b16 %v249
        %v433 = vunpack.c.l.b16 %v250
        %v434 = vunpack.c.l.b16 %v251
        %v435 = vunpack.c.l.b16 %v252
        %v436 = vunpack.c.l.b16 %v253
        %v437 = vunpack.c.l.b16 %v254
        %v438 = vunpack.c.l.b16 %v255
        %v439 = vunpack.c.l.b16 %v256
        %v440 = vunpack.c.l.b16 %v257
        %v441 = vunpack.c.l.b16 %v258
        %v442 = vunpack.c.l.b16 %v259
        %v443 = vunpack.c.l.b16 %v260
        %v444 = vunpack.c.l.b16 %v261
        %v445 = vunpack.c.l.b16 %v262
        %v446 = vunpack.c.l.b16 %v263
        %v447 = vunpack.c.l.b16 %v264
        %v448 = vunpack.c.l.b16 %v265
        %v449 = vunpack.c.l.b16 %v266
        %v450 = vunpack.c.l.b16 %v267
        %v451 = vunpack.c.l.b16 %v268
        %v452 = vunpack.c.l.b16 %v269
        %v453 = vunpack.c.l.b16 %v270
        %v454 = vunpack.c.l.b16 %v271
        %v455 = vunpack.c.l.b16 %v272
        %v456 = vunpack.c.l.b16 %v273
        %v457 = vunpack.c.l.b16 %v274
        %v458 = vunpack.c.l.b16 %v275
        %v459 = vunpack.c.l.b16 %v276
        %v460 = vunpack.c.l.b16 %v277
        %v461 = vunpack.c.l.b16 %v278
        %v462 = vunpack.c.l.b16 %v279
        %v463 = vunpack.c.l.b16 %v280
        %v464 = vunpack.c.l.b16 %v281
        %v465 = vunpack.c.l.b16 %v282
        %v466 = vunpack.c.l.b16 %v283
        %v467 = vunpack.c.l.b16 %v284
        %v468 = vunpack.c.l.b16 %v285
        %v469 = vunpack.c.l.b16 %v286
        %v470 = vunpack.c.l.b16 %v287
        %v471 = vunpack.c.l.b16 %v288
        %v472 = vunpack.c.l.b16 %v289
        %v473 = vunpack.c.l.b16 %v290
        %v474 = vunpack.c.l.b16 %v291
        %v475 = vunpack.c.l.b16 %v292
        %v476 = vunpack.c.l.b16 %v293
        %v477 = vunpack.c.l.b16 %v294
        %v478 = vunpack.c.l.b16 %v295
        %v479 = vunpack.c.l.b16 %v296
        %v480 = vunpack.c.l.b16 %v297
        %v481 = vunpack.c.l.b16 %v298
        %v482 = vunpack.c.l.b16 %v299
        %v483 = vunpack.c.l.b16 %v300
        %v484 = vunpack.c.l.b16 %v301
        %v485 = vunpack.c.l.b16 %v302
        %v486 = vunpack.c.l.b16 %v303
        %v487 = vunpack.c.l.b16 %v304
        %v488 = vunpack.c.l.b16 %v305
        %v489 = vunpack.c.l.b16 %v306
        %v490 = vunpack.c.l.b16 %v307
        %v491 = vunpack.c.l.b16 %v308
        %v492 = vunpack.c.l.b16 %v309
        %v493 = vunpack.c.l.b16 %v310
        %v494 = vunpack.c.l.b16 %v311
        %v495 = vunpack.c.l.b16 %v312
        %v496 = vunpack.c.l.b16 %v313
        %v497 = vunpack.c.l.b16 %v314
        %v498 = vunpack.c.l.b16 %v315
        %v499 = vunpack.c.l.b16 %v316
        %v500 = vunpack.c.l.b16 %v317
        %v501 = vunpack.c.l.b16 %v318
        %v502 = vunpack.c.l.b16 %v319
        %v503 = vunpack.c.l.b16 %v320
        %v504 = vunpack.c.l.b16 %v321
        %v505 = vunpack.c.l.b16 %v322
        %v506 = vunpack.c.l.b16 %v323
        %v507 = vunpack.c.l.b16 %v324
        %v508 = vunpack.c.l.b16 %v325
        %v509 = vunpack.c.l.b16 %v326
        %v510 = vunpack.c.l.b16 %v327
        %v511 = vunpack.c.l.b16 %v328
        %v512 = vunpack.c.l.b16 %v329
        %v513 = vunpack.c.l.b16 %v330
        %v514 = vunpack.c.l.b16 %v331
        %v515 = vpack.c.b16 %v431, %v430
        %v516 = vpack.c.b16 %v433, %v432
        %v517 = vpack.c.b16 %v435, %v434
        %v518 = vpack.c.b16 %v437, %v436
        %v519 = vpack.c.b16 %v439, %v438
        %v520 = vpack.c.b16 %v441, %v440
        %v521 = vpack.c.b16 %v443, %v442
        %v522 = vpack.c.b16 %v445, %v444
        %v523 = vpack.c.b16 %v447, %v446
        %v524 = vpack.c.b16 %v449, %v448
        %v525 = vpack.c.b16 %v451, %v450
        %v526 = vpack.c.b16 %v453, %v452
        %v527 = vpack.c.b16 %v455, %v454
        %v528 = vpack.c.b16 %v457, %v456
        %v529 = vpack.c.b16 %v459, %v458
        %v530 = vpack.c.b16 %v461, %v460
        %v531 = vpack.c.b16 %v463, %v462
        %v532 = vpack.c.b16 %v465, %v464
        %v533 = vpack.c.b16 %v467, %v466
        %v534 = vpack.c.b16 %v469, %v468
        %v535 = vpack.c.b16 %v471, %v470
        %v536 = vpack.c.b16 %v473, %v472
        %v537 = vpack.c.b16 %v475, %v474
        %v538 = vpack.c.b16 %v477, %v476
        %v539 = vpack.c.b16 %v479, %v478
        %v540 = vpack.c.b16 %v481, %v480
        %v541 = vpack.c.b16 %v483, %v482
        %v542 = vpack.c.b16 %v485, %v484
        %v543 = vpack.c.b16 %v487, %v486
        %v544 = vpack.c.b16 %v489, %v488
        %v545 = vpack.c.b16 %v491, %v490
        %v546 = vpack.c.b16 %v493, %v492
        %v547 = vpack.c.b16 %v495, %v494
        %v548 = vpack.c.b16 %v497, %v496
        %v549 = vpack.c.b16 %v499, %v498
        %v550 = vpack.c.b16 %v501, %v500
        %v551 = vpack.c.b16 %v503, %v502
        %v552 = vpack.c.b16 %v505, %v504
        %v553 = vpack.c.b16 %v507, %v506
        %v554 = vpack.c.b16 %v509, %v508
        %v555 = vpack.c.b16 %v511, %v510
        %v556 = vpack.c.b16 %v513, %v512
        %v557 = vpack.c.b16 %v514, %v514
        %v564 = vunpack.c.l.b16 %v332
        %v565 = vunpack.c.l.b16 %v333
        %v566 = vunpack.c.l.b16 %v334
        %v567 = vunpack.c.l.b16 %v335
        %v568 = vunpack.c.l.b16 %v336
        %v569 = vunpack.c.l.b16 %v337
        %v570 = vpack.c.b16 %v565, %v564
        %v571 = vpack.c.b16 %v567, %v566
        %v572 = vpack.c.b16 %v569, %v568
        %vm576 = vcmask 392192
        %v578 = vsel %vm576, %v515, 0
        %v581 = vsel %vm576, %v516, 0
        %v584 = vsel %vm576, %v517, 0
        %v587 = vsel %vm576, %v518, 0
        %v590 = vsel %vm576, %v519, 0
        %v593 = vsel %vm576, %v520, 0
        %v596 = vsel %vm576, %v521, 0
        %v599 = vsel %vm576, %v522, 0
        %v602 = vsel %vm576, %v523, 0
        %v605 = vsel %vm576, %v524, 0
        %v608 = vsel %vm576, %v525, 0
        %v611 = vsel %vm576, %v526, 0
        %v614 = vsel %vm576, %v527, 0
        %v617 = vsel %vm576, %v528, 0
        %v620 = vsel %vm576, %v529, 0
        %v623 = vsel %vm576, %v530, 0
        %v626 = vsel %vm576, %v531, 0
        %v629 = vsel %vm576, %v532, 0
        %v632 = vsel %vm576, %v533, 0
        %v635 = vsel %vm576, %v534, 0
        %v638 = vsel %vm576, %v535, 0
        %v641 = vsel %vm576, %v536, 0
        %v644 = vsel %vm576, %v537, 0
        %v647 = vsel %vm576, %v538, 0
        %v650 = vsel %vm576, %v539, 0
        %v653 = vsel %vm576, %v540, 0
        %v656 = vsel %vm576, %v541, 0
        %v659 = vsel %vm576, %v542, 0
        %v662 = vsel %vm576, %v543, 0
        %v665 = vsel %vm576, %v544, 0
        %v668 = vsel %vm576, %v545, 0
        %v671 = vsel %vm576, %v546, 0
        %v674 = vsel %vm576, %v547, 0
        %v677 = vsel %vm576, %v548, 0
        %v680 = vsel %vm576, %v549, 0
        %v683 = vsel %vm576, %v550, 0
        %v686 = vsel %vm576, %v551, 0
        %v689 = vsel %vm576, %v552, 0
        %v692 = vsel %vm576, %v553, 0
        %v695 = vsel %vm576, %v554, 0
        %v698 = vsel %vm576, %v555, 0
        %v701 = vsel %vm576, %v556, 0
        %v704 = vsel %vm576, %v557, 0
        %706 = vmatprep.subr.bf16.mxu0 0
        %707 = vmatpush1.bf16.msra.mxu0 %v570
        %708 = vmatprep.subr.bf16.mxu0 0
        %709 = vmatpush1.bf16.msra.mxu0 %v571
        %710 = vmatprep.subr.bf16.mxu0 0
        %711 = vmatpush1.bf16.msra.mxu0 %v572
        %712 = vmatprep.subr.bf16.mxu0 0
        %713 = vmatpush1.bf16.msra.mxu0 0
        %714 = vmatprep.subr.bf16.mxu0 0
        %715 = vmatpush1.bf16.msra.mxu0 0
        %716 = vmatprep.subr.bf16.mxu0 0
        %717 = vmatpush1.bf16.msra.mxu0 0
        %718 = vmatprep.subr.bf16.mxu0 0
        %719 = vmatpush1.bf16.msra.mxu0 0
        %720 = vmatprep.subr.bf16.mxu0 0
        %721 = vmatpush1.bf16.msra.mxu0 0
        %722 = vmatprep.subr.bf16.mxu0 0
        %723 = vmatpush1.bf16.msra.mxu0 0
        %724 = vmatprep.subr.bf16.mxu0 0
        %725 = vmatpush1.bf16.msra.mxu0 0
        %726 = vmatprep.subr.bf16.mxu0 0
        %727 = vmatpush1.bf16.msra.mxu0 0
        %728 = vmatprep.subr.bf16.mxu0 0
        %729 = vmatpush1.bf16.msra.mxu0 0
        %730 = vmatprep.subr.bf16.mxu0 0
        %731 = vmatpush1.bf16.msra.mxu0 0
        %732 = vmatprep.subr.bf16.mxu0 0
        %733 = vmatpush1.bf16.msra.mxu0 0
        %734 = vmatprep.subr.bf16.mxu0 0
        %735 = vmatpush1.bf16.msra.mxu0 0
        %736 = vmatprep.subr.bf16.mxu0 0
        %737 = vmatpush1.bf16.msra.mxu0 0
        %738 = vmatprep.mubr.bf16.mxu0 0
        %739 = vmatmul.mubr.bf16.gmra.mrb[0].mxu0 %v578
        %v740 = vpop.f32.mrb[0].mxu0
        %v741 = vadd.f32 %v343, %v740
        %v742 = vpop.f32.mrb[0].mxu0
        %v743 = vpop.f32.mrb[0].mxu0
        %v744 = vadd.f32 %v343, %v743
        %v745 = vpop.f32.mrb[0].mxu0
        %746 = vmatprep.mubr.bf16.mxu0 0
        %747 = vmatmul.mubr.bf16.gmra.mrb[0].mxu0 %v581
        %v748 = vpop.f32.mrb[0].mxu0
        %v749 = vadd.f32 %v343, %v748
        %v750 = vpop.f32.mrb[0].mxu0
        %v751 = vpop.f32.mrb[0].mxu0
        %v752 = vadd.f32 %v343, %v751
        %v753 = vpop.f32.mrb[0].mxu0
        %754 = vmatprep.mubr.bf16.mxu0 0
        %755 = vmatmul.mubr.bf16.gmra.mrb[0].mxu0 %v584
        %v756 = vpop.f32.mrb[0].mxu0
        %v757 = vadd.f32 %v343, %v756
        %v758 = vpop.f32.mrb[0].mxu0
        %v759 = vpop.f32.mrb[0].mxu0
        %v760 = vadd.f32 %v343, %v759
        %v761 = vpop.f32.mrb[0].mxu0
        %762 = vmatprep.mubr.bf16.mxu0 0
        %763 = vmatmul.mubr.bf16.gmra.mrb[0].mxu0 %v587
        %v764 = vpop.f32.mrb[0].mxu0
        %v765 = vadd.f32 %v343, %v764
        %v766 = vpop.f32.mrb[0].mxu0
        %v767 = vpop.f32.mrb[0].mxu0
        %v768 = vadd.f32 %v343, %v767
        %v769 = vpop.f32.mrb[0].mxu0
        %770 = vmatprep.mubr.bf16.mxu0 0
        %771 = vmatmul.mubr.bf16.gmra.mrb[0].mxu0 %v590
        %v772 = vpop.f32.mrb[0].mxu0
        %v773 = vadd.f32 %v343, %v772
        %v774 = vpop.f32.mrb[0].mxu0
        %v775 = vpop.f32.mrb[0].mxu0
        %v776 = vadd.f32 %v343, %v775
        %v777 = vpop.f32.mrb[0].mxu0
        %778 = vmatprep.mubr.bf16.mxu0 0
        %779 = vmatmul.mubr.bf16.gmra.mrb[0].mxu0 %v593
        %v780 = vpop.f32.mrb[0].mxu0
        %v781 = vadd.f32 %v343, %v780
        %v782 = vpop.f32.mrb[0].mxu0
        %v783 = vpop.f32.mrb[0].mxu0
        %v784 = vadd.f32 %v343, %v783
        %v785 = vpop.f32.mrb[0].mxu0
        %786 = vmatprep.mubr.bf16.mxu0 0
        %787 = vmatmul.mubr.bf16.gmra.mrb[0].mxu0 %v596
        %v788 = vpop.f32.mrb[0].mxu0
        %v789 = vadd.f32 %v343, %v788
        %v790 = vpop.f32.mrb[0].mxu0
        %v791 = vpop.f32.mrb[0].mxu0
        %v792 = vadd.f32 %v343, %v791
        %v793 = vpop.f32.mrb[0].mxu0
        %794 = vmatprep.mubr.bf16.mxu0 0
        %795 = vmatmul.mubr.bf16.gmra.mrb[0].mxu0 %v599
        %v796 = vpop.f32.mrb[0].mxu0
        %v797 = vadd.f32 %v343, %v796
        %v798 = vpop.f32.mrb[0].mxu0
        %v799 = vpop.f32.mrb[0].mxu0
        %v800 = vadd.f32 %v343, %v799
        %v801 = vpop.f32.mrb[0].mxu0
        %802 = vmatprep.mubr.bf16.mxu0 0
        %803 = vmatmul.mubr.bf16.gmra.mrb[0].mxu0 %v602
        %v804 = vpop.f32.mrb[0].mxu0
        %v805 = vadd.f32 %v343, %v804
        %v806 = vpop.f32.mrb[0].mxu0
        %v807 = vpop.f32.mrb[0].mxu0
        %v808 = vadd.f32 %v343, %v807
        %v809 = vpop.f32.mrb[0].mxu0
        %810 = vmatprep.mubr.bf16.mxu0 0
        %811 = vmatmul.mubr.bf16.gmra.mrb[0].mxu0 %v605
        %v812 = vpop.f32.mrb[0].mxu0
        %v813 = vadd.f32 %v343, %v812
        %v814 = vpop.f32.mrb[0].mxu0
        %v815 = vpop.f32.mrb[0].mxu0
        %v816 = vadd.f32 %v343, %v815
        %v817 = vpop.f32.mrb[0].mxu0
        %818 = vmatprep.mubr.bf16.mxu0 0
        %819 = vmatmul.mubr.bf16.gmra.mrb[0].mxu0 %v608
        %v820 = vpop.f32.mrb[0].mxu0
        %v821 = vadd.f32 %v343, %v820
        %v822 = vpop.f32.mrb[0].mxu0
        %v823 = vpop.f32.mrb[0].mxu0
        %v824 = vadd.f32 %v343, %v823
        %v825 = vpop.f32.mrb[0].mxu0
        %826 = vmatprep.mubr.bf16.mxu0 0
        %827 = vmatmul.mubr.bf16.gmra.mrb[0].mxu0 %v611
        %v828 = vpop.f32.mrb[0].mxu0
        %v829 = vadd.f32 %v343, %v828
        %v830 = vpop.f32.mrb[0].mxu0
        %v831 = vpop.f32.mrb[0].mxu0
        %v832 = vadd.f32 %v343, %v831
        %v833 = vpop.f32.mrb[0].mxu0
        %834 = vmatprep.mubr.bf16.mxu0 0
        %835 = vmatmul.mubr.bf16.gmra.mrb[0].mxu0 %v614
        %v836 = vpop.f32.mrb[0].mxu0
        %v837 = vadd.f32 %v343, %v836
        %v838 = vpop.f32.mrb[0].mxu0
        %v839 = vpop.f32.mrb[0].mxu0
        %v840 = vadd.f32 %v343, %v839
        %v841 = vpop.f32.mrb[0].mxu0
        %842 = vmatprep.mubr.bf16.mxu0 0
        %843 = vmatmul.mubr.bf16.gmra.mrb[0].mxu0 %v617
        %v844 = vpop.f32.mrb[0].mxu0
        %v845 = vadd.f32 %v343, %v844
        %v846 = vpop.f32.mrb[0].mxu0
        %v847 = vpop.f32.mrb[0].mxu0
        %v848 = vadd.f32 %v343, %v847
        %v849 = vpop.f32.mrb[0].mxu0
        %850 = vmatprep.mubr.bf16.mxu0 0
        %851 = vmatmul.mubr.bf16.gmra.mrb[0].mxu0 %v620
        %v852 = vpop.f32.mrb[0].mxu0
        %v853 = vadd.f32 %v343, %v852
        %v854 = vpop.f32.mrb[0].mxu0
        %v855 = vpop.f32.mrb[0].mxu0
        %v856 = vadd.f32 %v343, %v855
        %v857 = vpop.f32.mrb[0].mxu0
        %858 = vmatprep.mubr.bf16.mxu0 0
        %859 = vmatmul.mubr.bf16.gmra.mrb[0].mxu0 %v623
        %v860 = vpop.f32.mrb[0].mxu0
        %v861 = vadd.f32 %v343, %v860
        %v862 = vpop.f32.mrb[0].mxu0
        %v863 = vpop.f32.mrb[0].mxu0
        %v864 = vadd.f32 %v343, %v863
        %v865 = vpop.f32.mrb[0].mxu0
        %866 = vmatprep.mubr.bf16.mxu0 0
        %867 = vmatmul.mubr.bf16.gmra.mrb[0].mxu0 %v626
        %v868 = vpop.f32.mrb[0].mxu0
        %v869 = vadd.f32 %v343, %v868
        %v870 = vpop.f32.mrb[0].mxu0
        %v871 = vpop.f32.mrb[0].mxu0
        %v872 = vadd.f32 %v343, %v871
        %v873 = vpop.f32.mrb[0].mxu0
        %874 = vmatprep.mubr.bf16.mxu0 0
        %875 = vmatmul.mubr.bf16.gmra.mrb[0].mxu0 %v629
        %v876 = vpop.f32.mrb[0].mxu0
        %v877 = vadd.f32 %v343, %v876
        %v878 = vpop.f32.mrb[0].mxu0
        %v879 = vpop.f32.mrb[0].mxu0
        %v880 = vadd.f32 %v343, %v879
        %v881 = vpop.f32.mrb[0].mxu0
        %882 = vmatprep.mubr.bf16.mxu0 0
        %883 = vmatmul.mubr.bf16.gmra.mrb[0].mxu0 %v632
        %v884 = vpop.f32.mrb[0].mxu0
        %v885 = vadd.f32 %v343, %v884
        %v886 = vpop.f32.mrb[0].mxu0
        %v887 = vpop.f32.mrb[0].mxu0
        %v888 = vadd.f32 %v343, %v887
        %v889 = vpop.f32.mrb[0].mxu0
        %890 = vmatprep.mubr.bf16.mxu0 0
        %891 = vmatmul.mubr.bf16.gmra.mrb[0].mxu0 %v635
        %v892 = vpop.f32.mrb[0].mxu0
        %v893 = vadd.f32 %v343, %v892
        %v894 = vpop.f32.mrb[0].mxu0
        %v895 = vpop.f32.mrb[0].mxu0
        %v896 = vadd.f32 %v343, %v895
        %v897 = vpop.f32.mrb[0].mxu0
        %898 = vmatprep.mubr.bf16.mxu0 0
        %899 = vmatmul.mubr.bf16.gmra.mrb[0].mxu0 %v638
        %v900 = vpop.f32.mrb[0].mxu0
        %v901 = vadd.f32 %v343, %v900
        %v902 = vpop.f32.mrb[0].mxu0
        %v903 = vpop.f32.mrb[0].mxu0
        %v904 = vadd.f32 %v343, %v903
        %v905 = vpop.f32.mrb[0].mxu0
        %906 = vmatprep.mubr.bf16.mxu0 0
        %907 = vmatmul.mubr.bf16.gmra.mrb[0].mxu0 %v641
        %v908 = vpop.f32.mrb[0].mxu0
        %v909 = vadd.f32 %v343, %v908
        %v910 = vpop.f32.mrb[0].mxu0
        %v911 = vpop.f32.mrb[0].mxu0
        %v912 = vadd.f32 %v343, %v911
        %v913 = vpop.f32.mrb[0].mxu0
        %914 = vmatprep.mubr.bf16.mxu0 0
        %915 = vmatmul.mubr.bf16.gmra.mrb[0].mxu0 %v644
        %v916 = vpop.f32.mrb[0].mxu0
        %v917 = vadd.f32 %v343, %v916
        %v918 = vpop.f32.mrb[0].mxu0
        %v919 = vpop.f32.mrb[0].mxu0
        %v920 = vadd.f32 %v343, %v919
        %v921 = vpop.f32.mrb[0].mxu0
        %922 = vmatprep.mubr.bf16.mxu0 0
        %923 = vmatmul.mubr.bf16.gmra.mrb[0].mxu0 %v647
        %v924 = vpop.f32.mrb[0].mxu0
        %v925 = vadd.f32 %v343, %v924
        %v926 = vpop.f32.mrb[0].mxu0
        %v927 = vpop.f32.mrb[0].mxu0
        %v928 = vadd.f32 %v343, %v927
        %v929 = vpop.f32.mrb[0].mxu0
        %930 = vmatprep.mubr.bf16.mxu0 0
        %931 = vmatmul.mubr.bf16.gmra.mrb[0].mxu0 %v650
        %v932 = vpop.f32.mrb[0].mxu0
        %v933 = vadd.f32 %v343, %v932
        %v934 = vpop.f32.mrb[0].mxu0
        %v935 = vpop.f32.mrb[0].mxu0
        %v936 = vadd.f32 %v343, %v935
        %v937 = vpop.f32.mrb[0].mxu0
        %938 = vmatprep.mubr.bf16.mxu0 0
        %939 = vmatmul.mubr.bf16.gmra.mrb[0].mxu0 %v653
        %v940 = vpop.f32.mrb[0].mxu0
        %v941 = vadd.f32 %v343, %v940
        %v942 = vpop.f32.mrb[0].mxu0
        %v943 = vpop.f32.mrb[0].mxu0
        %v944 = vadd.f32 %v343, %v943
        %v945 = vpop.f32.mrb[0].mxu0
        %946 = vmatprep.mubr.bf16.mxu0 0
        %947 = vmatmul.mubr.bf16.gmra.mrb[0].mxu0 %v656
        %v948 = vpop.f32.mrb[0].mxu0
        %v949 = vadd.f32 %v343, %v948
        %v950 = vpop.f32.mrb[0].mxu0
        %v951 = vpop.f32.mrb[0].mxu0
        %v952 = vadd.f32 %v343, %v951
        %v953 = vpop.f32.mrb[0].mxu0
        %954 = vmatprep.mubr.bf16.mxu0 0
        %955 = vmatmul.mubr.bf16.gmra.mrb[0].mxu0 %v659
        %v956 = vpop.f32.mrb[0].mxu0
        %v957 = vadd.f32 %v343, %v956
        %v958 = vpop.f32.mrb[0].mxu0
        %v959 = vpop.f32.mrb[0].mxu0
        %v960 = vadd.f32 %v343, %v959
        %v961 = vpop.f32.mrb[0].mxu0
        %962 = vmatprep.mubr.bf16.mxu0 0
        %963 = vmatmul.mubr.bf16.gmra.mrb[0].mxu0 %v662
        %v964 = vpop.f32.mrb[0].mxu0
        %v965 = vadd.f32 %v343, %v964
        %v966 = vpop.f32.mrb[0].mxu0
        %v967 = vpop.f32.mrb[0].mxu0
        %v968 = vadd.f32 %v343, %v967
        %v969 = vpop.f32.mrb[0].mxu0
        %970 = vmatprep.mubr.bf16.mxu0 0
        %971 = vmatmul.mubr.bf16.gmra.mrb[0].mxu0 %v665
        %v972 = vpop.f32.mrb[0].mxu0
        %v973 = vadd.f32 %v343, %v972
        %v974 = vpop.f32.mrb[0].mxu0
        %v975 = vpop.f32.mrb[0].mxu0
        %v976 = vadd.f32 %v343, %v975
        %v977 = vpop.f32.mrb[0].mxu0
        %978 = vmatprep.mubr.bf16.mxu0 0
        %979 = vmatmul.mubr.bf16.gmra.mrb[0].mxu0 %v668
        %v980 = vpop.f32.mrb[0].mxu0
        %v981 = vadd.f32 %v343, %v980
        %v982 = vpop.f32.mrb[0].mxu0
        %v983 = vpop.f32.mrb[0].mxu0
        %v984 = vadd.f32 %v343, %v983
        %v985 = vpop.f32.mrb[0].mxu0
        %986 = vmatprep.mubr.bf16.mxu0 0
        %987 = vmatmul.mubr.bf16.gmra.mrb[0].mxu0 %v671
        %v988 = vpop.f32.mrb[0].mxu0
        %v989 = vadd.f32 %v343, %v988
        %v990 = vpop.f32.mrb[0].mxu0
        %v991 = vpop.f32.mrb[0].mxu0
        %v992 = vadd.f32 %v343, %v991
        %v993 = vpop.f32.mrb[0].mxu0
        %994 = vmatprep.mubr.bf16.mxu0 0
        %995 = vmatmul.mubr.bf16.gmra.mrb[0].mxu0 %v674
        %v996 = vpop.f32.mrb[0].mxu0
        %v997 = vadd.f32 %v343, %v996
        %v998 = vpop.f32.mrb[0].mxu0
        %v999 = vpop.f32.mrb[0].mxu0
        %v1000 = vadd.f32 %v343, %v999
        %v1001 = vpop.f32.mrb[0].mxu0
        %1002 = vmatprep.mubr.bf16.mxu0 0
        %1003 = vmatmul.mubr.bf16.gmra.mrb[0].mxu0 %v677
        %v1004 = vpop.f32.mrb[0].mxu0
        %v1005 = vadd.f32 %v343, %v1004
        %v1006 = vpop.f32.mrb[0].mxu0
        %v1007 = vpop.f32.mrb[0].mxu0
        %v1008 = vadd.f32 %v343, %v1007
        %v1009 = vpop.f32.mrb[0].mxu0
        %1010 = vmatprep.mubr.bf16.mxu0 0
        %1011 = vmatmul.mubr.bf16.gmra.mrb[0].mxu0 %v680
        %v1012 = vpop.f32.mrb[0].mxu0
        %v1013 = vadd.f32 %v343, %v1012
        %v1014 = vpop.f32.mrb[0].mxu0
        %v1015 = vpop.f32.mrb[0].mxu0
        %v1016 = vadd.f32 %v343, %v1015
        %v1017 = vpop.f32.mrb[0].mxu0
        %1018 = vmatprep.mubr.bf16.mxu0 0
        %1019 = vmatmul.mubr.bf16.gmra.mrb[0].mxu0 %v683
        %v1020 = vpop.f32.mrb[0].mxu0
        %v1021 = vadd.f32 %v343, %v1020
        %v1022 = vpop.f32.mrb[0].mxu0
        %v1023 = vpop.f32.mrb[0].mxu0
        %v1024 = vadd.f32 %v343, %v1023
        %v1025 = vpop.f32.mrb[0].mxu0
        %1026 = vmatprep.mubr.bf16.mxu0 0
        %1027 = vmatmul.mubr.bf16.gmra.mrb[0].mxu0 %v686
        %v1028 = vpop.f32.mrb[0].mxu0
        %v1029 = vadd.f32 %v343, %v1028
        %v1030 = vpop.f32.mrb[0].mxu0
        %v1031 = vpop.f32.mrb[0].mxu0
        %v1032 = vadd.f32 %v343, %v1031
        %v1033 = vpop.f32.mrb[0].mxu0
        %1034 = vmatprep.mubr.bf16.mxu0 0
        %1035 = vmatmul.mubr.bf16.gmra.mrb[0].mxu0 %v689
        %v1036 = vpop.f32.mrb[0].mxu0
        %v1037 = vadd.f32 %v343, %v1036
        %v1038 = vpop.f32.mrb[0].mxu0
        %v1039 = vpop.f32.mrb[0].mxu0
        %v1040 = vadd.f32 %v343, %v1039
        %v1041 = vpop.f32.mrb[0].mxu0
        %1042 = vmatprep.mubr.bf16.mxu0 0
        %1043 = vmatmul.mubr.bf16.gmra.mrb[0].mxu0 %v692
        %v1044 = vpop.f32.mrb[0].mxu0
        %v1045 = vadd.f32 %v343, %v1044
        %v1046 = vpop.f32.mrb[0].mxu0
        %v1047 = vpop.f32.mrb[0].mxu0
        %v1048 = vadd.f32 %v343, %v1047
        %v1049 = vpop.f32.mrb[0].mxu0
        %1050 = vmatprep.mubr.bf16.mxu0 0
        %1051 = vmatmul.mubr.bf16.gmra.mrb[0].mxu0 %v695
        %v1052 = vpop.f32.mrb[0].mxu0
        %v1053 = vadd.f32 %v343, %v1052
        %v1054 = vpop.f32.mrb[0].mxu0
        %v1055 = vpop.f32.mrb[0].mxu0
        %v1056 = vadd.f32 %v343, %v1055
        %v1057 = vpop.f32.mrb[0].mxu0
        %1058 = vmatprep.mubr.bf16.mxu0 0
        %1059 = vmatmul.mubr.bf16.gmra.mrb[0].mxu0 %v698
        %v1060 = vpop.f32.mrb[0].mxu0
        %v1061 = vadd.f32 %v343, %v1060
        %v1062 = vpop.f32.mrb[0].mxu0
        %v1063 = vpop.f32.mrb[0].mxu0
        %v1064 = vadd.f32 %v343, %v1063
        %v1065 = vpop.f32.mrb[0].mxu0
        %1066 = vmatprep.mubr.bf16.mxu0 0
        %1067 = vmatmul.mubr.bf16.gmra.mrb[0].mxu0 %v701
        %v1068 = vpop.f32.mrb[0].mxu0
        %v1069 = vadd.f32 %v343, %v1068
        %v1070 = vpop.f32.mrb[0].mxu0
        %v1071 = vpop.f32.mrb[0].mxu0
        %v1072 = vadd.f32 %v343, %v1071
        %v1073 = vpop.f32.mrb[0].mxu0
        %1074 = vmatprep.mubr.bf16.mxu0 0
        %1075 = vmatmul.mubr.bf16.gmra.mrb[0].mxu0 %v704
        %v1076 = vpop.f32.mrb[0].mxu0
        %v1077 = vadd.f32 %v343, %v1076
        %v1078 = vpop.f32.mrb[0].mxu0
        %v1079 = vpop.f32.mrb[0].mxu0
        %v1080 = vpop.f32.mrb[0].mxu0
        %1081 = vdwg.mxu0
        %1082 = vadd.xlane.f32.xlu0 %v741
        %v1083 = vpop.xlane.xlu0 %1082
        %1084 = vadd.xlane.f32.xlu0 %v744
        %v1085 = vpop.xlane.xlu0 %1084
        %1086 = vadd.xlane.f32.xlu0 %v749
        %v1087 = vpop.xlane.xlu0 %1086
        %1088 = vadd.xlane.f32.xlu0 %v752
        %v1089 = vpop.xlane.xlu0 %1088
        %1090 = vadd.xlane.f32.xlu0 %v757
        %v1091 = vpop.xlane.xlu0 %1090
        %1092 = vadd.xlane.f32.xlu0 %v760
        %v1093 = vpop.xlane.xlu0 %1092
        %1094 = vadd.xlane.f32.xlu0 %v765
        %v1095 = vpop.xlane.xlu0 %1094
        %1096 = vadd.xlane.f32.xlu0 %v768
        %v1097 = vpop.xlane.xlu0 %1096
        %1098 = vadd.xlane.f32.xlu0 %v773
        %v1099 = vpop.xlane.xlu0 %1098
        %1100 = vadd.xlane.f32.xlu0 %v776
        %v1101 = vpop.xlane.xlu0 %1100
        %1102 = vadd.xlane.f32.xlu0 %v781
        %v1103 = vpop.xlane.xlu0 %1102
        %1104 = vadd.xlane.f32.xlu0 %v784
        %v1105 = vpop.xlane.xlu0 %1104
        %1106 = vadd.xlane.f32.xlu0 %v789
        %v1107 = vpop.xlane.xlu0 %1106
        %1108 = vadd.xlane.f32.xlu0 %v792
        %v1109 = vpop.xlane.xlu0 %1108
        %1110 = vadd.xlane.f32.xlu0 %v797
        %v1111 = vpop.xlane.xlu0 %1110
        %1112 = vadd.xlane.f32.xlu0 %v800
        %v1113 = vpop.xlane.xlu0 %1112
        %1114 = vadd.xlane.f32.xlu0 %v805
        %v1115 = vpop.xlane.xlu0 %1114
        %1116 = vadd.xlane.f32.xlu0 %v808
        %v1117 = vpop.xlane.xlu0 %1116
        %1118 = vadd.xlane.f32.xlu0 %v813
        %v1119 = vpop.xlane.xlu0 %1118
        %1120 = vadd.xlane.f32.xlu0 %v816
        %v1121 = vpop.xlane.xlu0 %1120
        %1122 = vadd.xlane.f32.xlu0 %v821
        %v1123 = vpop.xlane.xlu0 %1122
        %1124 = vadd.xlane.f32.xlu0 %v824
        %v1125 = vpop.xlane.xlu0 %1124
        %1126 = vadd.xlane.f32.xlu0 %v829
        %v1127 = vpop.xlane.xlu0 %1126
        %1128 = vadd.xlane.f32.xlu0 %v832
        %v1129 = vpop.xlane.xlu0 %1128
        %1130 = vadd.xlane.f32.xlu0 %v837
        %v1131 = vpop.xlane.xlu0 %1130
        %1132 = vadd.xlane.f32.xlu0 %v840
        %v1133 = vpop.xlane.xlu0 %1132
        %1134 = vadd.xlane.f32.xlu0 %v845
        %v1135 = vpop.xlane.xlu0 %1134
        %1136 = vadd.xlane.f32.xlu0 %v848
        %v1137 = vpop.xlane.xlu0 %1136
        %1138 = vadd.xlane.f32.xlu0 %v853
        %v1139 = vpop.xlane.xlu0 %1138
        %1140 = vadd.xlane.f32.xlu0 %v856
        %v1141 = vpop.xlane.xlu0 %1140
        %1142 = vadd.xlane.f32.xlu0 %v861
        %v1143 = vpop.xlane.xlu0 %1142
        %1144 = vadd.xlane.f32.xlu0 %v864
        %v1145 = vpop.xlane.xlu0 %1144
        %1146 = vadd.xlane.f32.xlu0 %v869
        %v1147 = vpop.xlane.xlu0 %1146
        %1148 = vadd.xlane.f32.xlu0 %v872
        %v1149 = vpop.xlane.xlu0 %1148
        %1150 = vadd.xlane.f32.xlu0 %v877
        %v1151 = vpop.xlane.xlu0 %1150
        %1152 = vadd.xlane.f32.xlu0 %v880
        %v1153 = vpop.xlane.xlu0 %1152
        %1154 = vadd.xlane.f32.xlu0 %v885
        %v1155 = vpop.xlane.xlu0 %1154
        %1156 = vadd.xlane.f32.xlu0 %v888
        %v1157 = vpop.xlane.xlu0 %1156
        %1158 = vadd.xlane.f32.xlu0 %v893
        %v1159 = vpop.xlane.xlu0 %1158
        %1160 = vadd.xlane.f32.xlu0 %v896
        %v1161 = vpop.xlane.xlu0 %1160
        %1162 = vadd.xlane.f32.xlu0 %v901
        %v1163 = vpop.xlane.xlu0 %1162
        %1164 = vadd.xlane.f32.xlu0 %v904
        %v1165 = vpop.xlane.xlu0 %1164
        %1166 = vadd.xlane.f32.xlu0 %v909
        %v1167 = vpop.xlane.xlu0 %1166
        %1168 = vadd.xlane.f32.xlu0 %v912
        %v1169 = vpop.xlane.xlu0 %1168
        %1170 = vadd.xlane.f32.xlu0 %v917
        %v1171 = vpop.xlane.xlu0 %1170
        %1172 = vadd.xlane.f32.xlu0 %v920
        %v1173 = vpop.xlane.xlu0 %1172
        %1174 = vadd.xlane.f32.xlu0 %v925
        %v1175 = vpop.xlane.xlu0 %1174
        %1176 = vadd.xlane.f32.xlu0 %v928
        %v1177 = vpop.xlane.xlu0 %1176
        %1178 = vadd.xlane.f32.xlu0 %v933
        %v1179 = vpop.xlane.xlu0 %1178
        %1180 = vadd.xlane.f32.xlu0 %v936
        %v1181 = vpop.xlane.xlu0 %1180
        %1182 = vadd.xlane.f32.xlu0 %v941
        %v1183 = vpop.xlane.xlu0 %1182
        %1184 = vadd.xlane.f32.xlu0 %v944
        %v1185 = vpop.xlane.xlu0 %1184
        %1186 = vadd.xlane.f32.xlu0 %v949
        %v1187 = vpop.xlane.xlu0 %1186
        %1188 = vadd.xlane.f32.xlu0 %v952
        %v1189 = vpop.xlane.xlu0 %1188
        %1190 = vadd.xlane.f32.xlu0 %v957
        %v1191 = vpop.xlane.xlu0 %1190
        %1192 = vadd.xlane.f32.xlu0 %v960
        %v1193 = vpop.xlane.xlu0 %1192
        %1194 = vadd.xlane.f32.xlu0 %v965
        %v1195 = vpop.xlane.xlu0 %1194
        %1196 = vadd.xlane.f32.xlu0 %v968
        %v1197 = vpop.xlane.xlu0 %1196
        %1198 = vadd.xlane.f32.xlu0 %v973
        %v1199 = vpop.xlane.xlu0 %1198
        %1200 = vadd.xlane.f32.xlu0 %v976
        %v1201 = vpop.xlane.xlu0 %1200
        %1202 = vadd.xlane.f32.xlu0 %v981
        %v1203 = vpop.xlane.xlu0 %1202
        %1204 = vadd.xlane.f32.xlu0 %v984
        %v1205 = vpop.xlane.xlu0 %1204
        %1206 = vadd.xlane.f32.xlu0 %v989
        %v1207 = vpop.xlane.xlu0 %1206
        %1208 = vadd.xlane.f32.xlu0 %v992
        %v1209 = vpop.xlane.xlu0 %1208
        %1210 = vadd.xlane.f32.xlu0 %v997
        %v1211 = vpop.xlane.xlu0 %1210
        %1212 = vadd.xlane.f32.xlu0 %v1000
        %v1213 = vpop.xlane.xlu0 %1212
        %1214 = vadd.xlane.f32.xlu0 %v1005
        %v1215 = vpop.xlane.xlu0 %1214
        %1216 = vadd.xlane.f32.xlu0 %v1008
        %v1217 = vpop.xlane.xlu0 %1216
        %1218 = vadd.xlane.f32.xlu0 %v1013
        %v1219 = vpop.xlane.xlu0 %1218
        %1220 = vadd.xlane.f32.xlu0 %v1016
        %v1221 = vpop.xlane.xlu0 %1220
        %1222 = vadd.xlane.f32.xlu0 %v1021
        %v1223 = vpop.xlane.xlu0 %1222
        %1224 = vadd.xlane.f32.xlu0 %v1024
        %v1225 = vpop.xlane.xlu0 %1224
        %1226 = vadd.xlane.f32.xlu0 %v1029
        %v1227 = vpop.xlane.xlu0 %1226
        %1228 = vadd.xlane.f32.xlu0 %v1032
        %v1229 = vpop.xlane.xlu0 %1228
        %1230 = vadd.xlane.f32.xlu0 %v1037
        %v1231 = vpop.xlane.xlu0 %1230
        %1232 = vadd.xlane.f32.xlu0 %v1040
        %v1233 = vpop.xlane.xlu0 %1232
        %1234 = vadd.xlane.f32.xlu0 %v1045
        %v1235 = vpop.xlane.xlu0 %1234
        %1236 = vadd.xlane.f32.xlu0 %v1048
        %v1237 = vpop.xlane.xlu0 %1236
        %1238 = vadd.xlane.f32.xlu0 %v1053
        %v1239 = vpop.xlane.xlu0 %1238
        %1240 = vadd.xlane.f32.xlu0 %v1056
        %v1241 = vpop.xlane.xlu0 %1240
        %1242 = vadd.xlane.f32.xlu0 %v1061
        %v1243 = vpop.xlane.xlu0 %1242
        %1244 = vadd.xlane.f32.xlu0 %v1064
        %v1245 = vpop.xlane.xlu0 %1244
        %1246 = vadd.xlane.f32.xlu0 %v1069
        %v1247 = vpop.xlane.xlu0 %1246
        %1248 = vadd.xlane.f32.xlu0 %v1072
        %v1249 = vpop.xlane.xlu0 %1248
        %1250 = vadd.xlane.f32.xlu0 %v1077
        %v1251 = vpop.xlane.xlu0 %1250
        %v1252 = vrcp.pop 128.0
        %v1253 = vmul.f32 %v1083, %v1252
        %v1254 = vmul.f32 %v1085, %v1252
        %v1255 = vmul.f32 %v1087, %v1252
        %v1256 = vmul.f32 %v1089, %v1252
        %v1257 = vmul.f32 %v1091, %v1252
        %v1258 = vmul.f32 %v1093, %v1252
        %v1259 = vmul.f32 %v1095, %v1252
        %v1260 = vmul.f32 %v1097, %v1252
        %v1261 = vmul.f32 %v1099, %v1252
        %v1262 = vmul.f32 %v1101, %v1252
        %v1263 = vmul.f32 %v1103, %v1252
        %v1264 = vmul.f32 %v1105, %v1252
        %v1265 = vmul.f32 %v1107, %v1252
        %v1266 = vmul.f32 %v1109, %v1252
        %v1267 = vmul.f32 %v1111, %v1252
        %v1268 = vmul.f32 %v1113, %v1252
        %v1269 = vmul.f32 %v1115, %v1252
        %v1270 = vmul.f32 %v1117, %v1252
        %v1271 = vmul.f32 %v1119, %v1252
        %v1272 = vmul.f32 %v1121, %v1252
        %v1273 = vmul.f32 %v1123, %v1252
        %v1274 = vmul.f32 %v1125, %v1252
        %v1275 = vmul.f32 %v1127, %v1252
        %v1276 = vmul.f32 %v1129, %v1252
        %v1277 = vmul.f32 %v1131, %v1252
        %v1278 = vmul.f32 %v1133, %v1252
        %v1279 = vmul.f32 %v1135, %v1252
        %v1280 = vmul.f32 %v1137, %v1252
        %v1281 = vmul.f32 %v1139, %v1252
        %v1282 = vmul.f32 %v1141, %v1252
        %v1283 = vmul.f32 %v1143, %v1252
        %v1284 = vmul.f32 %v1145, %v1252
        %v1285 = vmul.f32 %v1147, %v1252
        %v1286 = vmul.f32 %v1149, %v1252
        %v1287 = vmul.f32 %v1151, %v1252
        %v1288 = vmul.f32 %v1153, %v1252
        %v1289 = vmul.f32 %v1155, %v1252
        %v1290 = vmul.f32 %v1157, %v1252
        %v1291 = vmul.f32 %v1159, %v1252
        %v1292 = vmul.f32 %v1161, %v1252
        %v1293 = vmul.f32 %v1163, %v1252
        %v1294 = vmul.f32 %v1165, %v1252
        %v1295 = vmul.f32 %v1167, %v1252
        %v1296 = vmul.f32 %v1169, %v1252
        %v1297 = vmul.f32 %v1171, %v1252
        %v1298 = vmul.f32 %v1173, %v1252
        %v1299 = vmul.f32 %v1175, %v1252
        %v1300 = vmul.f32 %v1177, %v1252
        %v1301 = vmul.f32 %v1179, %v1252
        %v1302 = vmul.f32 %v1181, %v1252
        %v1303 = vmul.f32 %v1183, %v1252
        %v1304 = vmul.f32 %v1185, %v1252
        %v1305 = vmul.f32 %v1187, %v1252
        %v1306 = vmul.f32 %v1189, %v1252
        %v1307 = vmul.f32 %v1191, %v1252
        %v1308 = vmul.f32 %v1193, %v1252
        %v1309 = vmul.f32 %v1195, %v1252
        %v1310 = vmul.f32 %v1197, %v1252
        %v1311 = vmul.f32 %v1199, %v1252
        %v1312 = vmul.f32 %v1201, %v1252
        %v1313 = vmul.f32 %v1203, %v1252
        %v1314 = vmul.f32 %v1205, %v1252
        %v1315 = vmul.f32 %v1207, %v1252
        %v1316 = vmul.f32 %v1209, %v1252
        %v1317 = vmul.f32 %v1211, %v1252
        %v1318 = vmul.f32 %v1213, %v1252
        %v1319 = vmul.f32 %v1215, %v1252
        %v1320 = vmul.f32 %v1217, %v1252
        %v1321 = vmul.f32 %v1219, %v1252
        %v1322 = vmul.f32 %v1221, %v1252
        %v1323 = vmul.f32 %v1223, %v1252
        %v1324 = vmul.f32 %v1225, %v1252
        %v1325 = vmul.f32 %v1227, %v1252
        %v1326 = vmul.f32 %v1229, %v1252
        %v1327 = vmul.f32 %v1231, %v1252
        %v1328 = vmul.f32 %v1233, %v1252
        %v1329 = vmul.f32 %v1235, %v1252
        %v1330 = vmul.f32 %v1237, %v1252
        %v1331 = vmul.f32 %v1239, %v1252
        %v1332 = vmul.f32 %v1241, %v1252
        %v1333 = vmul.f32 %v1243, %v1252
        %v1334 = vmul.f32 %v1245, %v1252
        %v1335 = vmul.f32 %v1247, %v1252
        %v1336 = vmul.f32 %v1249, %v1252
        %v1337 = vmul.f32 %v1251, %v1252
        %v1338 = vsub.f32 %v741, %v1253
        %v1339 = vsub.f32 %v744, %v1254
        %v1340 = vsub.f32 %v749, %v1255
        %v1341 = vsub.f32 %v752, %v1256
        %v1342 = vsub.f32 %v757, %v1257
        %v1343 = vsub.f32 %v760, %v1258
        %v1344 = vsub.f32 %v765, %v1259
        %v1345 = vsub.f32 %v768, %v1260
        %v1346 = vsub.f32 %v773, %v1261
        %v1347 = vsub.f32 %v776, %v1262
        %v1348 = vsub.f32 %v781, %v1263
        %v1349 = vsub.f32 %v784, %v1264
        %v1350 = vsub.f32 %v789, %v1265
        %v1351 = vsub.f32 %v792, %v1266
        %v1352 = vsub.f32 %v797, %v1267
        %v1353 = vsub.f32 %v800, %v1268
        %v1354 = vsub.f32 %v805, %v1269
        %v1355 = vsub.f32 %v808, %v1270
        %v1356 = vsub.f32 %v813, %v1271
        %v1357 = vsub.f32 %v816, %v1272
        %v1358 = vsub.f32 %v821, %v1273
        %v1359 = vsub.f32 %v824, %v1274
        %v1360 = vsub.f32 %v829, %v1275
        %v1361 = vsub.f32 %v832, %v1276
        %v1362 = vsub.f32 %v837, %v1277
        %v1363 = vsub.f32 %v840, %v1278
        %v1364 = vsub.f32 %v845, %v1279
        %v1365 = vsub.f32 %v848, %v1280
        %v1366 = vsub.f32 %v853, %v1281
        %v1367 = vsub.f32 %v856, %v1282
        %v1368 = vsub.f32 %v861, %v1283
        %v1369 = vsub.f32 %v864, %v1284
        %v1370 = vsub.f32 %v869, %v1285
        %v1371 = vsub.f32 %v872, %v1286
        %v1372 = vsub.f32 %v877, %v1287
        %v1373 = vsub.f32 %v880, %v1288
        %v1374 = vsub.f32 %v885, %v1289
        %v1375 = vsub.f32 %v888, %v1290
        %v1376 = vsub.f32 %v893, %v1291
        %v1377 = vsub.f32 %v896, %v1292
        %v1378 = vsub.f32 %v901, %v1293
        %v1379 = vsub.f32 %v904, %v1294
        %v1380 = vsub.f32 %v909, %v1295
        %v1381 = vsub.f32 %v912, %v1296
        %v1382 = vsub.f32 %v917, %v1297
        %v1383 = vsub.f32 %v920, %v1298
        %v1384 = vsub.f32 %v925, %v1299
        %v1385 = vsub.f32 %v928, %v1300
        %v1386 = vsub.f32 %v933, %v1301
        %v1387 = vsub.f32 %v936, %v1302
        %v1388 = vsub.f32 %v941, %v1303
        %v1389 = vsub.f32 %v944, %v1304
        %v1390 = vsub.f32 %v949, %v1305
        %v1391 = vsub.f32 %v952, %v1306
        %v1392 = vsub.f32 %v957, %v1307
        %v1393 = vsub.f32 %v960, %v1308
        %v1394 = vsub.f32 %v965, %v1309
        %v1395 = vsub.f32 %v968, %v1310
        %v1396 = vsub.f32 %v973, %v1311
        %v1397 = vsub.f32 %v976, %v1312
        %v1398 = vsub.f32 %v981, %v1313
        %v1399 = vsub.f32 %v984, %v1314
        %v1400 = vsub.f32 %v989, %v1315
        %v1401 = vsub.f32 %v992, %v1316
        %v1402 = vsub.f32 %v997, %v1317
        %v1403 = vsub.f32 %v1000, %v1318
        %v1404 = vsub.f32 %v1005, %v1319
        %v1405 = vsub.f32 %v1008, %v1320
        %v1406 = vsub.f32 %v1013, %v1321
        %v1407 = vsub.f32 %v1016, %v1322
        %v1408 = vsub.f32 %v1021, %v1323
        %v1409 = vsub.f32 %v1024, %v1324
        %v1410 = vsub.f32 %v1029, %v1325
        %v1411 = vsub.f32 %v1032, %v1326
        %v1412 = vsub.f32 %v1037, %v1327
        %v1413 = vsub.f32 %v1040, %v1328
        %v1414 = vsub.f32 %v1045, %v1329
        %v1415 = vsub.f32 %v1048, %v1330
        %v1416 = vsub.f32 %v1053, %v1331
        %v1417 = vsub.f32 %v1056, %v1332
        %v1418 = vsub.f32 %v1061, %v1333
        %v1419 = vsub.f32 %v1064, %v1334
        %v1420 = vsub.f32 %v1069, %v1335
        %v1421 = vsub.f32 %v1072, %v1336
        %v1422 = vsub.f32 %v1077, %v1337
        %v1423 = vmul.f32 %v1338, %v1338
        %v1424 = vmul.f32 %v1339, %v1339
        %v1425 = vmul.f32 %v1340, %v1340
        %v1426 = vmul.f32 %v1341, %v1341
        %v1427 = vmul.f32 %v1342, %v1342
        %v1428 = vmul.f32 %v1343, %v1343
        %v1429 = vmul.f32 %v1344, %v1344
        %v1430 = vmul.f32 %v1345, %v1345
        %v1431 = vmul.f32 %v1346, %v1346
        %v1432 = vmul.f32 %v1347, %v1347
        %v1433 = vmul.f32 %v1348, %v1348
        %v1434 = vmul.f32 %v1349, %v1349
        %v1435 = vmul.f32 %v1350, %v1350
        %v1436 = vmul.f32 %v1351, %v1351
        %v1437 = vmul.f32 %v1352, %v1352
        %v1438 = vmul.f32 %v1353, %v1353
        %v1439 = vmul.f32 %v1354, %v1354
        %v1440 = vmul.f32 %v1355, %v1355
        %v1441 = vmul.f32 %v1356, %v1356
        %v1442 = vmul.f32 %v1357, %v1357
        %v1443 = vmul.f32 %v1358, %v1358
        %v1444 = vmul.f32 %v1359, %v1359
        %v1445 = vmul.f32 %v1360, %v1360
        %v1446 = vmul.f32 %v1361, %v1361
        %v1447 = vmul.f32 %v1362, %v1362
        %v1448 = vmul.f32 %v1363, %v1363
        %v1449 = vmul.f32 %v1364, %v1364
        %v1450 = vmul.f32 %v1365, %v1365
        %v1451 = vmul.f32 %v1366, %v1366
        %v1452 = vmul.f32 %v1367, %v1367
        %v1453 = vmul.f32 %v1368, %v1368
        %v1454 = vmul.f32 %v1369, %v1369
        %v1455 = vmul.f32 %v1370, %v1370
        %v1456 = vmul.f32 %v1371, %v1371
        %v1457 = vmul.f32 %v1372, %v1372
        %v1458 = vmul.f32 %v1373, %v1373
        %v1459 = vmul.f32 %v1374, %v1374
        %v1460 = vmul.f32 %v1375, %v1375
        %v1461 = vmul.f32 %v1376, %v1376
        %v1462 = vmul.f32 %v1377, %v1377
        %v1463 = vmul.f32 %v1378, %v1378
        %v1464 = vmul.f32 %v1379, %v1379
        %v1465 = vmul.f32 %v1380, %v1380
        %v1466 = vmul.f32 %v1381, %v1381
        %v1467 = vmul.f32 %v1382, %v1382
        %v1468 = vmul.f32 %v1383, %v1383
        %v1469 = vmul.f32 %v1384, %v1384
        %v1470 = vmul.f32 %v1385, %v1385
        %v1471 = vmul.f32 %v1386, %v1386
        %v1472 = vmul.f32 %v1387, %v1387
        %v1473 = vmul.f32 %v1388, %v1388
        %v1474 = vmul.f32 %v1389, %v1389
        %v1475 = vmul.f32 %v1390, %v1390
        %v1476 = vmul.f32 %v1391, %v1391
        %v1477 = vmul.f32 %v1392, %v1392
        %v1478 = vmul.f32 %v1393, %v1393
        %v1479 = vmul.f32 %v1394, %v1394
        %v1480 = vmul.f32 %v1395, %v1395
        %v1481 = vmul.f32 %v1396, %v1396
        %v1482 = vmul.f32 %v1397, %v1397
        %v1483 = vmul.f32 %v1398, %v1398
        %v1484 = vmul.f32 %v1399, %v1399
        %v1485 = vmul.f32 %v1400, %v1400
        %v1486 = vmul.f32 %v1401, %v1401
        %v1487 = vmul.f32 %v1402, %v1402
        %v1488 = vmul.f32 %v1403, %v1403
        %v1489 = vmul.f32 %v1404, %v1404
        %v1490 = vmul.f32 %v1405, %v1405
        %v1491 = vmul.f32 %v1406, %v1406
        %v1492 = vmul.f32 %v1407, %v1407
        %v1493 = vmul.f32 %v1408, %v1408
        %v1494 = vmul.f32 %v1409, %v1409
        %v1495 = vmul.f32 %v1410, %v1410
        %v1496 = vmul.f32 %v1411, %v1411
        %v1497 = vmul.f32 %v1412, %v1412
        %v1498 = vmul.f32 %v1413, %v1413
        %v1499 = vmul.f32 %v1414, %v1414
        %v1500 = vmul.f32 %v1415, %v1415
        %v1501 = vmul.f32 %v1416, %v1416
        %v1502 = vmul.f32 %v1417, %v1417
        %v1503 = vmul.f32 %v1418, %v1418
        %v1504 = vmul.f32 %v1419, %v1419
        %v1505 = vmul.f32 %v1420, %v1420
        %v1506 = vmul.f32 %v1421, %v1421
        %v1507 = vmul.f32 %v1422, %v1422
        %1508 = vadd.xlane.f32.xlu0 %v1423
        %v1509 = vpop.xlane.xlu0 %1508
        %1510 = vadd.xlane.f32.xlu0 %v1424
        %v1511 = vpop.xlane.xlu0 %1510
        %1512 = vadd.xlane.f32.xlu0 %v1425
        %v1513 = vpop.xlane.xlu0 %1512
        %1514 = vadd.xlane.f32.xlu0 %v1426
        %v1515 = vpop.xlane.xlu0 %1514
        %1516 = vadd.xlane.f32.xlu0 %v1427
        %v1517 = vpop.xlane.xlu0 %1516
        %1518 = vadd.xlane.f32.xlu0 %v1428
        %v1519 = vpop.xlane.xlu0 %1518
        %1520 = vadd.xlane.f32.xlu0 %v1429
        %v1521 = vpop.xlane.xlu0 %1520
        %1522 = vadd.xlane.f32.xlu0 %v1430
        %v1523 = vpop.xlane.xlu0 %1522
        %1524 = vadd.xlane.f32.xlu0 %v1431
        %v1525 = vpop.xlane.xlu0 %1524
        %1526 = vadd.xlane.f32.xlu0 %v1432
        %v1527 = vpop.xlane.xlu0 %1526
        %1528 = vadd.xlane.f32.xlu0 %v1433
        %v1529 = vpop.xlane.xlu0 %1528
        %1530 = vadd.xlane.f32.xlu0 %v1434
        %v1531 = vpop.xlane.xlu0 %1530
        %1532 = vadd.xlane.f32.xlu0 %v1435
        %v1533 = vpop.xlane.xlu0 %1532
        %1534 = vadd.xlane.f32.xlu0 %v1436
        %v1535 = vpop.xlane.xlu0 %1534
        %1536 = vadd.xlane.f32.xlu0 %v1437
        %v1537 = vpop.xlane.xlu0 %1536
        %1538 = vadd.xlane.f32.xlu0 %v1438
        %v1539 = vpop.xlane.xlu0 %1538
        %1540 = vadd.xlane.f32.xlu0 %v1439
        %v1541 = vpop.xlane.xlu0 %1540
        %1542 = vadd.xlane.f32.xlu0 %v1440
        %v1543 = vpop.xlane.xlu0 %1542
        %1544 = vadd.xlane.f32.xlu0 %v1441
        %v1545 = vpop.xlane.xlu0 %1544
        %1546 = vadd.xlane.f32.xlu0 %v1442
        %v1547 = vpop.xlane.xlu0 %1546
        %1548 = vadd.xlane.f32.xlu0 %v1443
        %v1549 = vpop.xlane.xlu0 %1548
        %1550 = vadd.xlane.f32.xlu0 %v1444
        %v1551 = vpop.xlane.xlu0 %1550
        %1552 = vadd.xlane.f32.xlu0 %v1445
        %v1553 = vpop.xlane.xlu0 %1552
        %1554 = vadd.xlane.f32.xlu0 %v1446
        %v1555 = vpop.xlane.xlu0 %1554
        %1556 = vadd.xlane.f32.xlu0 %v1447
        %v1557 = vpop.xlane.xlu0 %1556
        %1558 = vadd.xlane.f32.xlu0 %v1448
        %v1559 = vpop.xlane.xlu0 %1558
        %1560 = vadd.xlane.f32.xlu0 %v1449
        %v1561 = vpop.xlane.xlu0 %1560
        %1562 = vadd.xlane.f32.xlu0 %v1450
        %v1563 = vpop.xlane.xlu0 %1562
        %1564 = vadd.xlane.f32.xlu0 %v1451
        %v1565 = vpop.xlane.xlu0 %1564
        %1566 = vadd.xlane.f32.xlu0 %v1452
        %v1567 = vpop.xlane.xlu0 %1566
        %1568 = vadd.xlane.f32.xlu0 %v1453
        %v1569 = vpop.xlane.xlu0 %1568
        %1570 = vadd.xlane.f32.xlu0 %v1454
        %v1571 = vpop.xlane.xlu0 %1570
        %1572 = vadd.xlane.f32.xlu0 %v1455
        %v1573 = vpop.xlane.xlu0 %1572
        %1574 = vadd.xlane.f32.xlu0 %v1456
        %v1575 = vpop.xlane.xlu0 %1574
        %1576 = vadd.xlane.f32.xlu0 %v1457
        %v1577 = vpop.xlane.xlu0 %1576
        %1578 = vadd.xlane.f32.xlu0 %v1458
        %v1579 = vpop.xlane.xlu0 %1578
        %1580 = vadd.xlane.f32.xlu0 %v1459
        %v1581 = vpop.xlane.xlu0 %1580
        %1582 = vadd.xlane.f32.xlu0 %v1460
        %v1583 = vpop.xlane.xlu0 %1582
        %1584 = vadd.xlane.f32.xlu0 %v1461
        %v1585 = vpop.xlane.xlu0 %1584
        %1586 = vadd.xlane.f32.xlu0 %v1462
        %v1587 = vpop.xlane.xlu0 %1586
        %1588 = vadd.xlane.f32.xlu0 %v1463
        %v1589 = vpop.xlane.xlu0 %1588
        %1590 = vadd.xlane.f32.xlu0 %v1464
        %v1591 = vpop.xlane.xlu0 %1590
        %1592 = vadd.xlane.f32.xlu0 %v1465
        %v1593 = vpop.xlane.xlu0 %1592
        %1594 = vadd.xlane.f32.xlu0 %v1466
        %v1595 = vpop.xlane.xlu0 %1594
        %1596 = vadd.xlane.f32.xlu0 %v1467
        %v1597 = vpop.xlane.xlu0 %1596
        %1598 = vadd.xlane.f32.xlu0 %v1468
        %v1599 = vpop.xlane.xlu0 %1598
        %1600 = vadd.xlane.f32.xlu0 %v1469
        %v1601 = vpop.xlane.xlu0 %1600
        %1602 = vadd.xlane.f32.xlu0 %v1470
        %v1603 = vpop.xlane.xlu0 %1602
        %1604 = vadd.xlane.f32.xlu0 %v1471
        %v1605 = vpop.xlane.xlu0 %1604
        %1606 = vadd.xlane.f32.xlu0 %v1472
        %v1607 = vpop.xlane.xlu0 %1606
        %1608 = vadd.xlane.f32.xlu0 %v1473
        %v1609 = vpop.xlane.xlu0 %1608
        %1610 = vadd.xlane.f32.xlu0 %v1474
        %v1611 = vpop.xlane.xlu0 %1610
        %1612 = vadd.xlane.f32.xlu0 %v1475
        %v1613 = vpop.xlane.xlu0 %1612
        %1614 = vadd.xlane.f32.xlu0 %v1476
        %v1615 = vpop.xlane.xlu0 %1614
        %1616 = vadd.xlane.f32.xlu0 %v1477
        %v1617 = vpop.xlane.xlu0 %1616
        %1618 = vadd.xlane.f32.xlu0 %v1478
        %v1619 = vpop.xlane.xlu0 %1618
        %1620 = vadd.xlane.f32.xlu0 %v1479
        %v1621 = vpop.xlane.xlu0 %1620
        %1622 = vadd.xlane.f32.xlu0 %v1480
        %v1623 = vpop.xlane.xlu0 %1622
        %1624 = vadd.xlane.f32.xlu0 %v1481
        %v1625 = vpop.xlane.xlu0 %1624
        %1626 = vadd.xlane.f32.xlu0 %v1482
        %v1627 = vpop.xlane.xlu0 %1626
        %1628 = vadd.xlane.f32.xlu0 %v1483
        %v1629 = vpop.xlane.xlu0 %1628
        %1630 = vadd.xlane.f32.xlu0 %v1484
        %v1631 = vpop.xlane.xlu0 %1630
        %1632 = vadd.xlane.f32.xlu0 %v1485
        %v1633 = vpop.xlane.xlu0 %1632
        %1634 = vadd.xlane.f32.xlu0 %v1486
        %v1635 = vpop.xlane.xlu0 %1634
        %1636 = vadd.xlane.f32.xlu0 %v1487
        %v1637 = vpop.xlane.xlu0 %1636
        %1638 = vadd.xlane.f32.xlu0 %v1488
        %v1639 = vpop.xlane.xlu0 %1638
        %1640 = vadd.xlane.f32.xlu0 %v1489
        %v1641 = vpop.xlane.xlu0 %1640
        %1642 = vadd.xlane.f32.xlu0 %v1490
        %v1643 = vpop.xlane.xlu0 %1642
        %1644 = vadd.xlane.f32.xlu0 %v1491
        %v1645 = vpop.xlane.xlu0 %1644
        %1646 = vadd.xlane.f32.xlu0 %v1492
        %v1647 = vpop.xlane.xlu0 %1646
        %1648 = vadd.xlane.f32.xlu0 %v1493
        %v1649 = vpop.xlane.xlu0 %1648
        %1650 = vadd.xlane.f32.xlu0 %v1494
        %v1651 = vpop.xlane.xlu0 %1650
        %1652 = vadd.xlane.f32.xlu0 %v1495
        %v1653 = vpop.xlane.xlu0 %1652
        %1654 = vadd.xlane.f32.xlu0 %v1496
        %v1655 = vpop.xlane.xlu0 %1654
        %1656 = vadd.xlane.f32.xlu0 %v1497
        %v1657 = vpop.xlane.xlu0 %1656
        %1658 = vadd.xlane.f32.xlu0 %v1498
        %v1659 = vpop.xlane.xlu0 %1658
        %1660 = vadd.xlane.f32.xlu0 %v1499
        %v1661 = vpop.xlane.xlu0 %1660
        %1662 = vadd.xlane.f32.xlu0 %v1500
        %v1663 = vpop.xlane.xlu0 %1662
        %1664 = vadd.xlane.f32.xlu0 %v1501
        %v1665 = vpop.xlane.xlu0 %1664
        %1666 = vadd.xlane.f32.xlu0 %v1502
        %v1667 = vpop.xlane.xlu0 %1666
        %1668 = vadd.xlane.f32.xlu0 %v1503
        %v1669 = vpop.xlane.xlu0 %1668
        %1670 = vadd.xlane.f32.xlu0 %v1504
        %v1671 = vpop.xlane.xlu0 %1670
        %1672 = vadd.xlane.f32.xlu0 %v1505
        %v1673 = vpop.xlane.xlu0 %1672
        %1674 = vadd.xlane.f32.xlu0 %v1506
        %v1675 = vpop.xlane.xlu0 %1674
        %1676 = vadd.xlane.f32.xlu0 %v1507
        %v1677 = vpop.xlane.xlu0 %1676
        %v1678 = vmul.f32 %v1509, %v1252
        %v1679 = vmul.f32 %v1511, %v1252
        %v1680 = vmul.f32 %v1513, %v1252
        %v1681 = vmul.f32 %v1515, %v1252
        %v1682 = vmul.f32 %v1517, %v1252
        %v1683 = vmul.f32 %v1519, %v1252
        %v1684 = vmul.f32 %v1521, %v1252
        %v1685 = vmul.f32 %v1523, %v1252
        %v1686 = vmul.f32 %v1525, %v1252
        %v1687 = vmul.f32 %v1527, %v1252
        %v1688 = vmul.f32 %v1529, %v1252
        %v1689 = vmul.f32 %v1531, %v1252
        %v1690 = vmul.f32 %v1533, %v1252
        %v1691 = vmul.f32 %v1535, %v1252
        %v1692 = vmul.f32 %v1537, %v1252
        %v1693 = vmul.f32 %v1539, %v1252
        %v1694 = vmul.f32 %v1541, %v1252
        %v1695 = vmul.f32 %v1543, %v1252
        %v1696 = vmul.f32 %v1545, %v1252
        %v1697 = vmul.f32 %v1547, %v1252
        %v1698 = vmul.f32 %v1549, %v1252
        %v1699 = vmul.f32 %v1551, %v1252
        %v1700 = vmul.f32 %v1553, %v1252
        %v1701 = vmul.f32 %v1555, %v1252
        %v1702 = vmul.f32 %v1557, %v1252
        %v1703 = vmul.f32 %v1559, %v1252
        %v1704 = vmul.f32 %v1561, %v1252
        %v1705 = vmul.f32 %v1563, %v1252
        %v1706 = vmul.f32 %v1565, %v1252
        %v1707 = vmul.f32 %v1567, %v1252
        %v1708 = vmul.f32 %v1569, %v1252
        %v1709 = vmul.f32 %v1571, %v1252
        %v1710 = vmul.f32 %v1573, %v1252
        %v1711 = vmul.f32 %v1575, %v1252
        %v1712 = vmul.f32 %v1577, %v1252
        %v1713 = vmul.f32 %v1579, %v1252
        %v1714 = vmul.f32 %v1581, %v1252
        %v1715 = vmul.f32 %v1583, %v1252
        %v1716 = vmul.f32 %v1585, %v1252
        %v1717 = vmul.f32 %v1587, %v1252
        %v1718 = vmul.f32 %v1589, %v1252
        %v1719 = vmul.f32 %v1591, %v1252
        %v1720 = vmul.f32 %v1593, %v1252
        %v1721 = vmul.f32 %v1595, %v1252
        %v1722 = vmul.f32 %v1597, %v1252
        %v1723 = vmul.f32 %v1599, %v1252
        %v1724 = vmul.f32 %v1601, %v1252
        %v1725 = vmul.f32 %v1603, %v1252
        %v1726 = vmul.f32 %v1605, %v1252
        %v1727 = vmul.f32 %v1607, %v1252
        %v1728 = vmul.f32 %v1609, %v1252
        %v1729 = vmul.f32 %v1611, %v1252
        %v1730 = vmul.f32 %v1613, %v1252
        %v1731 = vmul.f32 %v1615, %v1252
        %v1732 = vmul.f32 %v1617, %v1252
        %v1733 = vmul.f32 %v1619, %v1252
        %v1734 = vmul.f32 %v1621, %v1252
        %v1735 = vmul.f32 %v1623, %v1252
        %v1736 = vmul.f32 %v1625, %v1252
        %v1737 = vmul.f32 %v1627, %v1252
        %v1738 = vmul.f32 %v1629, %v1252
        %v1739 = vmul.f32 %v1631, %v1252
        %v1740 = vmul.f32 %v1633, %v1252
        %v1741 = vmul.f32 %v1635, %v1252
        %v1742 = vmul.f32 %v1637, %v1252
        %v1743 = vmul.f32 %v1639, %v1252
        %v1744 = vmul.f32 %v1641, %v1252
        %v1745 = vmul.f32 %v1643, %v1252
        %v1746 = vmul.f32 %v1645, %v1252
        %v1747 = vmul.f32 %v1647, %v1252
        %v1748 = vmul.f32 %v1649, %v1252
        %v1749 = vmul.f32 %v1651, %v1252
        %v1750 = vmul.f32 %v1653, %v1252
        %v1751 = vmul.f32 %v1655, %v1252
        %v1752 = vmul.f32 %v1657, %v1252
        %v1753 = vmul.f32 %v1659, %v1252
        %v1754 = vmul.f32 %v1661, %v1252
        %v1755 = vmul.f32 %v1663, %v1252
        %v1756 = vmul.f32 %v1665, %v1252
        %v1757 = vmul.f32 %v1667, %v1252
        %v1758 = vmul.f32 %v1669, %v1252
        %v1759 = vmul.f32 %v1671, %v1252
        %v1760 = vmul.f32 %v1673, %v1252
        %v1761 = vmul.f32 %v1675, %v1252
        %v1762 = vmul.f32 %v1677, %v1252
        %v1763 = vadd.f32 %v1678, 1e-05
        %v1764 = vadd.f32 %v1679, 1e-05
        %v1765 = vadd.f32 %v1680, 1e-05
        %v1766 = vadd.f32 %v1681, 1e-05
        %v1767 = vadd.f32 %v1682, 1e-05
        %v1768 = vadd.f32 %v1683, 1e-05
        %v1769 = vadd.f32 %v1684, 1e-05
        %v1770 = vadd.f32 %v1685, 1e-05
        %v1771 = vadd.f32 %v1686, 1e-05
        %v1772 = vadd.f32 %v1687, 1e-05
        %v1773 = vadd.f32 %v1688, 1e-05
        %v1774 = vadd.f32 %v1689, 1e-05
        %v1775 = vadd.f32 %v1690, 1e-05
        %v1776 = vadd.f32 %v1691, 1e-05
        %v1777 = vadd.f32 %v1692, 1e-05
        %v1778 = vadd.f32 %v1693, 1e-05
        %v1779 = vadd.f32 %v1694, 1e-05
        %v1780 = vadd.f32 %v1695, 1e-05
        %v1781 = vadd.f32 %v1696, 1e-05
        %v1782 = vadd.f32 %v1697, 1e-05
        %v1783 = vadd.f32 %v1698, 1e-05
        %v1784 = vadd.f32 %v1699, 1e-05
        %v1785 = vadd.f32 %v1700, 1e-05
        %v1786 = vadd.f32 %v1701, 1e-05
        %v1787 = vadd.f32 %v1702, 1e-05
        %v1788 = vadd.f32 %v1703, 1e-05
        %v1789 = vadd.f32 %v1704, 1e-05
        %v1790 = vadd.f32 %v1705, 1e-05
        %v1791 = vadd.f32 %v1706, 1e-05
        %v1792 = vadd.f32 %v1707, 1e-05
        %v1793 = vadd.f32 %v1708, 1e-05
        %v1794 = vadd.f32 %v1709, 1e-05
        %v1795 = vadd.f32 %v1710, 1e-05
        %v1796 = vadd.f32 %v1711, 1e-05
        %v1797 = vadd.f32 %v1712, 1e-05
        %v1798 = vadd.f32 %v1713, 1e-05
        %v1799 = vadd.f32 %v1714, 1e-05
        %v1800 = vadd.f32 %v1715, 1e-05
        %v1801 = vadd.f32 %v1716, 1e-05
        %v1802 = vadd.f32 %v1717, 1e-05
        %v1803 = vadd.f32 %v1718, 1e-05
        %v1804 = vadd.f32 %v1719, 1e-05
        %v1805 = vadd.f32 %v1720, 1e-05
        %v1806 = vadd.f32 %v1721, 1e-05
        %v1807 = vadd.f32 %v1722, 1e-05
        %v1808 = vadd.f32 %v1723, 1e-05
        %v1809 = vadd.f32 %v1724, 1e-05
        %v1810 = vadd.f32 %v1725, 1e-05
        %v1811 = vadd.f32 %v1726, 1e-05
        %v1812 = vadd.f32 %v1727, 1e-05
        %v1813 = vadd.f32 %v1728, 1e-05
        %v1814 = vadd.f32 %v1729, 1e-05
        %v1815 = vadd.f32 %v1730, 1e-05
        %v1816 = vadd.f32 %v1731, 1e-05
        %v1817 = vadd.f32 %v1732, 1e-05
        %v1818 = vadd.f32 %v1733, 1e-05
        %v1819 = vadd.f32 %v1734, 1e-05
        %v1820 = vadd.f32 %v1735, 1e-05
        %v1821 = vadd.f32 %v1736, 1e-05
        %v1822 = vadd.f32 %v1737, 1e-05
        %v1823 = vadd.f32 %v1738, 1e-05
        %v1824 = vadd.f32 %v1739, 1e-05
        %v1825 = vadd.f32 %v1740, 1e-05
        %v1826 = vadd.f32 %v1741, 1e-05
        %v1827 = vadd.f32 %v1742, 1e-05
        %v1828 = vadd.f32 %v1743, 1e-05
        %v1829 = vadd.f32 %v1744, 1e-05
        %v1830 = vadd.f32 %v1745, 1e-05
        %v1831 = vadd.f32 %v1746, 1e-05
        %v1832 = vadd.f32 %v1747, 1e-05
        %v1833 = vadd.f32 %v1748, 1e-05
        %v1834 = vadd.f32 %v1749, 1e-05
        %v1835 = vadd.f32 %v1750, 1e-05
        %v1836 = vadd.f32 %v1751, 1e-05
        %v1837 = vadd.f32 %v1752, 1e-05
        %v1838 = vadd.f32 %v1753, 1e-05
        %v1839 = vadd.f32 %v1754, 1e-05
        %v1840 = vadd.f32 %v1755, 1e-05
        %v1841 = vadd.f32 %v1756, 1e-05
        %v1842 = vadd.f32 %v1757, 1e-05
        %v1843 = vadd.f32 %v1758, 1e-05
        %v1844 = vadd.f32 %v1759, 1e-05
        %v1845 = vadd.f32 %v1760, 1e-05
        %v1846 = vadd.f32 %v1761, 1e-05
        %v1847 = vadd.f32 %v1762, 1e-05
        %v1848 = vrsqrt.pop %v1763
        %v1849 = vrsqrt.pop %v1764
        %v1850 = vrsqrt.pop %v1765
        %v1851 = vrsqrt.pop %v1766
        %v1852 = vrsqrt.pop %v1767
        %v1853 = vrsqrt.pop %v1768
        %v1854 = vrsqrt.pop %v1769
        %v1855 = vrsqrt.pop %v1770
        %v1856 = vrsqrt.pop %v1771
        %v1857 = vrsqrt.pop %v1772
        %v1858 = vrsqrt.pop %v1773
        %v1859 = vrsqrt.pop %v1774
        %v1860 = vrsqrt.pop %v1775
        %v1861 = vrsqrt.pop %v1776
        %v1862 = vrsqrt.pop %v1777
        %v1863 = vrsqrt.pop %v1778
        %v1864 = vrsqrt.pop %v1779
        %v1865 = vrsqrt.pop %v1780
        %v1866 = vrsqrt.pop %v1781
        %v1867 = vrsqrt.pop %v1782
        %v1868 = vrsqrt.pop %v1783
        %v1869 = vrsqrt.pop %v1784
        %v1870 = vrsqrt.pop %v1785
        %v1871 = vrsqrt.pop %v1786
        %v1872 = vrsqrt.pop %v1787
        %v1873 = vrsqrt.pop %v1788
        %v1874 = vrsqrt.pop %v1789
        %v1875 = vrsqrt.pop %v1790
        %v1876 = vrsqrt.pop %v1791
        %v1877 = vrsqrt.pop %v1792
        %v1878 = vrsqrt.pop %v1793
        %v1879 = vrsqrt.pop %v1794
        %v1880 = vrsqrt.pop %v1795
        %v1881 = vrsqrt.pop %v1796
        %v1882 = vrsqrt.pop %v1797
        %v1883 = vrsqrt.pop %v1798
        %v1884 = vrsqrt.pop %v1799
        %v1885 = vrsqrt.pop %v1800
        %v1886 = vrsqrt.pop %v1801
        %v1887 = vrsqrt.pop %v1802
        %v1888 = vrsqrt.pop %v1803
        %v1889 = vrsqrt.pop %v1804
        %v1890 = vrsqrt.pop %v1805
        %v1891 = vrsqrt.pop %v1806
        %v1892 = vrsqrt.pop %v1807
        %v1893 = vrsqrt.pop %v1808
        %v1894 = vrsqrt.pop %v1809
        %v1895 = vrsqrt.pop %v1810
        %v1896 = vrsqrt.pop %v1811
        %v1897 = vrsqrt.pop %v1812
        %v1898 = vrsqrt.pop %v1813
        %v1899 = vrsqrt.pop %v1814
        %v1900 = vrsqrt.pop %v1815
        %v1901 = vrsqrt.pop %v1816
        %v1902 = vrsqrt.pop %v1817
        %v1903 = vrsqrt.pop %v1818
        %v1904 = vrsqrt.pop %v1819
        %v1905 = vrsqrt.pop %v1820
        %v1906 = vrsqrt.pop %v1821
        %v1907 = vrsqrt.pop %v1822
        %v1908 = vrsqrt.pop %v1823
        %v1909 = vrsqrt.pop %v1824
        %v1910 = vrsqrt.pop %v1825
        %v1911 = vrsqrt.pop %v1826
        %v1912 = vrsqrt.pop %v1827
        %v1913 = vrsqrt.pop %v1828
        %v1914 = vrsqrt.pop %v1829
        %v1915 = vrsqrt.pop %v1830
        %v1916 = vrsqrt.pop %v1831
        %v1917 = vrsqrt.pop %v1832
        %v1918 = vrsqrt.pop %v1833
        %v1919 = vrsqrt.pop %v1834
        %v1920 = vrsqrt.pop %v1835
        %v1921 = vrsqrt.pop %v1836
        %v1922 = vrsqrt.pop %v1837
        %v1923 = vrsqrt.pop %v1838
        %v1924 = vrsqrt.pop %v1839
        %v1925 = vrsqrt.pop %v1840
        %v1926 = vrsqrt.pop %v1841
        %v1927 = vrsqrt.pop %v1842
        %v1928 = vrsqrt.pop %v1843
        %v1929 = vrsqrt.pop %v1844
        %v1930 = vrsqrt.pop %v1845
        %v1931 = vrsqrt.pop %v1846
        %v1932 = vrsqrt.pop %v1847
        %v1933 = vmul.f32 %v1338, %v1848
        %v1934 = vmul.f32 %v1339, %v1849
        %v1935 = vmul.f32 %v1340, %v1850
        %v1936 = vmul.f32 %v1341, %v1851
        %v1937 = vmul.f32 %v1342, %v1852
        %v1938 = vmul.f32 %v1343, %v1853
        %v1939 = vmul.f32 %v1344, %v1854
        %v1940 = vmul.f32 %v1345, %v1855
        %v1941 = vmul.f32 %v1346, %v1856
        %v1942 = vmul.f32 %v1347, %v1857
        %v1943 = vmul.f32 %v1348, %v1858
        %v1944 = vmul.f32 %v1349, %v1859
        %v1945 = vmul.f32 %v1350, %v1860
        %v1946 = vmul.f32 %v1351, %v1861
        %v1947 = vmul.f32 %v1352, %v1862
        %v1948 = vmul.f32 %v1353, %v1863
        %v1949 = vmul.f32 %v1354, %v1864
        %v1950 = vmul.f32 %v1355, %v1865
        %v1951 = vmul.f32 %v1356, %v1866
        %v1952 = vmul.f32 %v1357, %v1867
        %v1953 = vmul.f32 %v1358, %v1868
        %v1954 = vmul.f32 %v1359, %v1869
        %v1955 = vmul.f32 %v1360, %v1870
        %v1956 = vmul.f32 %v1361, %v1871
        %v1957 = vmul.f32 %v1362, %v1872
        %v1958 = vmul.f32 %v1363, %v1873
        %v1959 = vmul.f32 %v1364, %v1874
        %v1960 = vmul.f32 %v1365, %v1875
        %v1961 = vmul.f32 %v1366, %v1876
        %v1962 = vmul.f32 %v1367, %v1877
        %v1963 = vmul.f32 %v1368, %v1878
        %v1964 = vmul.f32 %v1369, %v1879
        %v1965 = vmul.f32 %v1370, %v1880
        %v1966 = vmul.f32 %v1371, %v1881
        %v1967 = vmul.f32 %v1372, %v1882
        %v1968 = vmul.f32 %v1373, %v1883
        %v1969 = vmul.f32 %v1374, %v1884
        %v1970 = vmul.f32 %v1375, %v1885
        %v1971 = vmul.f32 %v1376, %v1886
        %v1972 = vmul.f32 %v1377, %v1887
        %v1973 = vmul.f32 %v1378, %v1888
        %v1974 = vmul.f32 %v1379, %v1889
        %v1975 = vmul.f32 %v1380, %v1890
        %v1976 = vmul.f32 %v1381, %v1891
        %v1977 = vmul.f32 %v1382, %v1892
        %v1978 = vmul.f32 %v1383, %v1893
        %v1979 = vmul.f32 %v1384, %v1894
        %v1980 = vmul.f32 %v1385, %v1895
        %v1981 = vmul.f32 %v1386, %v1896
        %v1982 = vmul.f32 %v1387, %v1897
        %v1983 = vmul.f32 %v1388, %v1898
        %v1984 = vmul.f32 %v1389, %v1899
        %v1985 = vmul.f32 %v1390, %v1900
        %v1986 = vmul.f32 %v1391, %v1901
        %v1987 = vmul.f32 %v1392, %v1902
        %v1988 = vmul.f32 %v1393, %v1903
        %v1989 = vmul.f32 %v1394, %v1904
        %v1990 = vmul.f32 %v1395, %v1905
        %v1991 = vmul.f32 %v1396, %v1906
        %v1992 = vmul.f32 %v1397, %v1907
        %v1993 = vmul.f32 %v1398, %v1908
        %v1994 = vmul.f32 %v1399, %v1909
        %v1995 = vmul.f32 %v1400, %v1910
        %v1996 = vmul.f32 %v1401, %v1911
        %v1997 = vmul.f32 %v1402, %v1912
        %v1998 = vmul.f32 %v1403, %v1913
        %v1999 = vmul.f32 %v1404, %v1914
        %v2000 = vmul.f32 %v1405, %v1915
        %v2001 = vmul.f32 %v1406, %v1916
        %v2002 = vmul.f32 %v1407, %v1917
        %v2003 = vmul.f32 %v1408, %v1918
        %v2004 = vmul.f32 %v1409, %v1919
        %v2005 = vmul.f32 %v1410, %v1920
        %v2006 = vmul.f32 %v1411, %v1921
        %v2007 = vmul.f32 %v1412, %v1922
        %v2008 = vmul.f32 %v1413, %v1923
        %v2009 = vmul.f32 %v1414, %v1924
        %v2010 = vmul.f32 %v1415, %v1925
        %v2011 = vmul.f32 %v1416, %v1926
        %v2012 = vmul.f32 %v1417, %v1927
        %v2013 = vmul.f32 %v1418, %v1928
        %v2014 = vmul.f32 %v1419, %v1929
        %v2015 = vmul.f32 %v1420, %v1930
        %v2016 = vmul.f32 %v1421, %v1931
        %v2017 = vmul.f32 %v1422, %v1932
        %v2018 = vld [vmem:[%s3] sm:$0x1]
        %v2020 = vlaneseq
        %v2021 = vshrl.u32 %v2020, 7
        %v2022 = vsub.s32 0, %v2021
        %v2023 = vrot.slane %v2018, %v2022
        %v2025 = vmul.f32 %v1933, %v2023
        %v2026 = vmul.f32 %v1934, %v2023
        %v2027 = vmul.f32 %v1935, %v2023
        %v2028 = vmul.f32 %v1936, %v2023
        %v2029 = vmul.f32 %v1937, %v2023
        %v2030 = vmul.f32 %v1938, %v2023
        %v2031 = vmul.f32 %v1939, %v2023
        %v2032 = vmul.f32 %v1940, %v2023
        %v2033 = vmul.f32 %v1941, %v2023
        %v2034 = vmul.f32 %v1942, %v2023
        %v2035 = vmul.f32 %v1943, %v2023
        %v2036 = vmul.f32 %v1944, %v2023
        %v2037 = vmul.f32 %v1945, %v2023
        %v2038 = vmul.f32 %v1946, %v2023
        %v2039 = vmul.f32 %v1947, %v2023
        %v2040 = vmul.f32 %v1948, %v2023
        %v2041 = vmul.f32 %v1949, %v2023
        %v2042 = vmul.f32 %v1950, %v2023
        %v2043 = vmul.f32 %v1951, %v2023
        %v2044 = vmul.f32 %v1952, %v2023
        %v2045 = vmul.f32 %v1953, %v2023
        %v2046 = vmul.f32 %v1954, %v2023
        %v2047 = vmul.f32 %v1955, %v2023
        %v2048 = vmul.f32 %v1956, %v2023
        %v2049 = vmul.f32 %v1957, %v2023
        %v2050 = vmul.f32 %v1958, %v2023
        %v2051 = vmul.f32 %v1959, %v2023
        %v2052 = vmul.f32 %v1960, %v2023
        %v2053 = vmul.f32 %v1961, %v2023
        %v2054 = vmul.f32 %v1962, %v2023
        %v2055 = vmul.f32 %v1963, %v2023
        %v2056 = vmul.f32 %v1964, %v2023
        %v2057 = vmul.f32 %v1965, %v2023
        %v2058 = vmul.f32 %v1966, %v2023
        %v2059 = vmul.f32 %v1967, %v2023
        %v2060 = vmul.f32 %v1968, %v2023
        %v2061 = vmul.f32 %v1969, %v2023
        %v2062 = vmul.f32 %v1970, %v2023
        %v2063 = vmul.f32 %v1971, %v2023
        %v2064 = vmul.f32 %v1972, %v2023
        %v2065 = vmul.f32 %v1973, %v2023
        %v2066 = vmul.f32 %v1974, %v2023
        %v2067 = vmul.f32 %v1975, %v2023
        %v2068 = vmul.f32 %v1976, %v2023
        %v2069 = vmul.f32 %v1977, %v2023
        %v2070 = vmul.f32 %v1978, %v2023
        %v2071 = vmul.f32 %v1979, %v2023
        %v2072 = vmul.f32 %v1980, %v2023
        %v2073 = vmul.f32 %v1981, %v2023
        %v2074 = vmul.f32 %v1982, %v2023
        %v2075 = vmul.f32 %v1983, %v2023
        %v2076 = vmul.f32 %v1984, %v2023
        %v2077 = vmul.f32 %v1985, %v2023
        %v2078 = vmul.f32 %v1986, %v2023
        %v2079 = vmul.f32 %v1987, %v2023
        %v2080 = vmul.f32 %v1988, %v2023
        %v2081 = vmul.f32 %v1989, %v2023
        %v2082 = vmul.f32 %v1990, %v2023
        %v2083 = vmul.f32 %v1991, %v2023
        %v2084 = vmul.f32 %v1992, %v2023
        %v2085 = vmul.f32 %v1993, %v2023
        %v2086 = vmul.f32 %v1994, %v2023
        %v2087 = vmul.f32 %v1995, %v2023
        %v2088 = vmul.f32 %v1996, %v2023
        %v2089 = vmul.f32 %v1997, %v2023
        %v2090 = vmul.f32 %v1998, %v2023
        %v2091 = vmul.f32 %v1999, %v2023
        %v2092 = vmul.f32 %v2000, %v2023
        %v2093 = vmul.f32 %v2001, %v2023
        %v2094 = vmul.f32 %v2002, %v2023
        %v2095 = vmul.f32 %v2003, %v2023
        %v2096 = vmul.f32 %v2004, %v2023
        %v2097 = vmul.f32 %v2005, %v2023
        %v2098 = vmul.f32 %v2006, %v2023
        %v2099 = vmul.f32 %v2007, %v2023
        %v2100 = vmul.f32 %v2008, %v2023
        %v2101 = vmul.f32 %v2009, %v2023
        %v2102 = vmul.f32 %v2010, %v2023
        %v2103 = vmul.f32 %v2011, %v2023
        %v2104 = vmul.f32 %v2012, %v2023
        %v2105 = vmul.f32 %v2013, %v2023
        %v2106 = vmul.f32 %v2014, %v2023
        %v2107 = vmul.f32 %v2015, %v2023
        %v2108 = vmul.f32 %v2016, %v2023
        %v2109 = vmul.f32 %v2017, %v2023
        %v2110 = vld [vmem:[%s4] sm:$0x1]
        %v2112 = vlaneseq
        %v2113 = vshrl.u32 %v2112, 7
        %v2114 = vsub.s32 0, %v2113
        %v2115 = vrot.slane %v2110, %v2114
        %v2117 = vadd.f32 %v2025, %v2115
        %v2118 = vadd.f32 %v2026, %v2115
        %v2119 = vadd.f32 %v2027, %v2115
        %v2120 = vadd.f32 %v2028, %v2115
        %v2121 = vadd.f32 %v2029, %v2115
        %v2122 = vadd.f32 %v2030, %v2115
        %v2123 = vadd.f32 %v2031, %v2115
        %v2124 = vadd.f32 %v2032, %v2115
        %v2125 = vadd.f32 %v2033, %v2115
        %v2126 = vadd.f32 %v2034, %v2115
        %v2127 = vadd.f32 %v2035, %v2115
        %v2128 = vadd.f32 %v2036, %v2115
        %v2129 = vadd.f32 %v2037, %v2115
        %v2130 = vadd.f32 %v2038, %v2115
        %v2131 = vadd.f32 %v2039, %v2115
        %v2132 = vadd.f32 %v2040, %v2115
        %v2133 = vadd.f32 %v2041, %v2115
        %v2134 = vadd.f32 %v2042, %v2115
        %v2135 = vadd.f32 %v2043, %v2115
        %v2136 = vadd.f32 %v2044, %v2115
        %v2137 = vadd.f32 %v2045, %v2115
        %v2138 = vadd.f32 %v2046, %v2115
        %v2139 = vadd.f32 %v2047, %v2115
        %v2140 = vadd.f32 %v2048, %v2115
        %v2141 = vadd.f32 %v2049, %v2115
        %v2142 = vadd.f32 %v2050, %v2115
        %v2143 = vadd.f32 %v2051, %v2115
        %v2144 = vadd.f32 %v2052, %v2115
        %v2145 = vadd.f32 %v2053, %v2115
        %v2146 = vadd.f32 %v2054, %v2115
        %v2147 = vadd.f32 %v2055, %v2115
        %v2148 = vadd.f32 %v2056, %v2115
        %v2149 = vadd.f32 %v2057, %v2115
        %v2150 = vadd.f32 %v2058, %v2115
        %v2151 = vadd.f32 %v2059, %v2115
        %v2152 = vadd.f32 %v2060, %v2115
        %v2153 = vadd.f32 %v2061, %v2115
        %v2154 = vadd.f32 %v2062, %v2115
        %v2155 = vadd.f32 %v2063, %v2115
        %v2156 = vadd.f32 %v2064, %v2115
        %v2157 = vadd.f32 %v2065, %v2115
        %v2158 = vadd.f32 %v2066, %v2115
        %v2159 = vadd.f32 %v2067, %v2115
        %v2160 = vadd.f32 %v2068, %v2115
        %v2161 = vadd.f32 %v2069, %v2115
        %v2162 = vadd.f32 %v2070, %v2115
        %v2163 = vadd.f32 %v2071, %v2115
        %v2164 = vadd.f32 %v2072, %v2115
        %v2165 = vadd.f32 %v2073, %v2115
        %v2166 = vadd.f32 %v2074, %v2115
        %v2167 = vadd.f32 %v2075, %v2115
        %v2168 = vadd.f32 %v2076, %v2115
        %v2169 = vadd.f32 %v2077, %v2115
        %v2170 = vadd.f32 %v2078, %v2115
        %v2171 = vadd.f32 %v2079, %v2115
        %v2172 = vadd.f32 %v2080, %v2115
        %v2173 = vadd.f32 %v2081, %v2115
        %v2174 = vadd.f32 %v2082, %v2115
        %v2175 = vadd.f32 %v2083, %v2115
        %v2176 = vadd.f32 %v2084, %v2115
        %v2177 = vadd.f32 %v2085, %v2115
        %v2178 = vadd.f32 %v2086, %v2115
        %v2179 = vadd.f32 %v2087, %v2115
        %v2180 = vadd.f32 %v2088, %v2115
        %v2181 = vadd.f32 %v2089, %v2115
        %v2182 = vadd.f32 %v2090, %v2115
        %v2183 = vadd.f32 %v2091, %v2115
        %v2184 = vadd.f32 %v2092, %v2115
        %v2185 = vadd.f32 %v2093, %v2115
        %v2186 = vadd.f32 %v2094, %v2115
        %v2187 = vadd.f32 %v2095, %v2115
        %v2188 = vadd.f32 %v2096, %v2115
        %v2189 = vadd.f32 %v2097, %v2115
        %v2190 = vadd.f32 %v2098, %v2115
        %v2191 = vadd.f32 %v2099, %v2115
        %v2192 = vadd.f32 %v2100, %v2115
        %v2193 = vadd.f32 %v2101, %v2115
        %v2194 = vadd.f32 %v2102, %v2115
        %v2195 = vadd.f32 %v2103, %v2115
        %v2196 = vadd.f32 %v2104, %v2115
        %v2197 = vadd.f32 %v2105, %v2115
        %v2198 = vadd.f32 %v2106, %v2115
        %v2199 = vadd.f32 %v2107, %v2115
        %v2200 = vadd.f32 %v2108, %v2115
        %v2201 = vadd.f32 %v2109, %v2115
        %2202 = vst [vmem:[%s226] sm:$0xff] %v2117
        %2203 = vst [vmem:[%s226 + $0x8] sm:$0xff] %v2118
        %2204 = vst [vmem:[%s226 + $0x10] sm:$0xff] %v2119
        %2205 = vst [vmem:[%s226 + $0x18] sm:$0xff] %v2120
        %2206 = vst [vmem:[%s226 + $0x20] sm:$0xff] %v2121
        %2207 = vst [vmem:[%s226 + $0x28] sm:$0xff] %v2122
        %2208 = vst [vmem:[%s226 + $0x30] sm:$0xff] %v2123
        %2209 = vst [vmem:[%s226 + $0x38] sm:$0xff] %v2124
        %2210 = vst [vmem:[%s226 + $0x40] sm:$0xff] %v2125
        %2211 = vst [vmem:[%s226 + $0x48] sm:$0xff] %v2126
        %2212 = vst [vmem:[%s226 + $0x50] sm:$0xff] %v2127
        %2213 = vst [vmem:[%s226 + $0x58] sm:$0xff] %v2128
        %2214 = vst [vmem:[%s226 + $0x60] sm:$0xff] %v2129
        %2215 = vst [vmem:[%s226 + $0x68] sm:$0xff] %v2130
        %2216 = vst [vmem:[%s226 + $0x70] sm:$0xff] %v2131
        %2217 = vst [vmem:[%s226 + $0x78] sm:$0xff] %v2132
        %2218 = vst [vmem:[%s226 + $0x80] sm:$0xff] %v2133
        %2219 = vst [vmem:[%s226 + $0x88] sm:$0xff] %v2134
        %2220 = vst [vmem:[%s226 + $0x90] sm:$0xff] %v2135
        %2221 = vst [vmem:[%s226 + $0x98] sm:$0xff] %v2136
        %2222 = vst [vmem:[%s226 + $0xa0] sm:$0xff] %v2137
        %2223 = vst [vmem:[%s226 + $0xa8] sm:$0xff] %v2138
        %2224 = vst [vmem:[%s226 + $0xb0] sm:$0xff] %v2139
        %2225 = vst [vmem:[%s226 + $0xb8] sm:$0xff] %v2140
        %2226 = vst [vmem:[%s226 + $0xc0] sm:$0xff] %v2141
        %2227 = vst [vmem:[%s226 + $0xc8] sm:$0xff] %v2142
        %2228 = vst [vmem:[%s226 + $0xd0] sm:$0xff] %v2143
        %2229 = vst [vmem:[%s226 + $0xd8] sm:$0xff] %v2144
        %2230 = vst [vmem:[%s226 + $0xe0] sm:$0xff] %v2145
        %2231 = vst [vmem:[%s226 + $0xe8] sm:$0xff] %v2146
        %2232 = vst [vmem:[%s226 + $0xf0] sm:$0xff] %v2147
        %2233 = vst [vmem:[%s226 + $0xf8] sm:$0xff] %v2148
        %2234 = vst [vmem:[%s226 + $0x100] sm:$0xff] %v2149
        %2235 = vst [vmem:[%s226 + $0x108] sm:$0xff] %v2150
        %2236 = vst [vmem:[%s226 + $0x110] sm:$0xff] %v2151
        %2237 = vst [vmem:[%s226 + $0x118] sm:$0xff] %v2152
        %2238 = vst [vmem:[%s226 + $0x120] sm:$0xff] %v2153
        %2239 = vst [vmem:[%s226 + $0x128] sm:$0xff] %v2154
        %2240 = vst [vmem:[%s226 + $0x130] sm:$0xff] %v2155
        %2241 = vst [vmem:[%s226 + $0x138] sm:$0xff] %v2156
        %2242 = vst [vmem:[%s226 + $0x140] sm:$0xff] %v2157
        %2243 = vst [vmem:[%s226 + $0x148] sm:$0xff] %v2158
        %2244 = vst [vmem:[%s226 + $0x150] sm:$0xff] %v2159
        %2245 = vst [vmem:[%s226 + $0x158] sm:$0xff] %v2160
        %2246 = vst [vmem:[%s226 + $0x160] sm:$0xff] %v2161
        %2247 = vst [vmem:[%s226 + $0x168] sm:$0xff] %v2162
        %2248 = vst [vmem:[%s226 + $0x170] sm:$0xff] %v2163
        %2249 = vst [vmem:[%s226 + $0x178] sm:$0xff] %v2164
        %2250 = vst [vmem:[%s226 + $0x180] sm:$0xff] %v2165
        %2251 = vst [vmem:[%s226 + $0x188] sm:$0xff] %v2166
        %2252 = vst [vmem:[%s226 + $0x190] sm:$0xff] %v2167
        %2253 = vst [vmem:[%s226 + $0x198] sm:$0xff] %v2168
        %2254 = vst [vmem:[%s226 + $0x1a0] sm:$0xff] %v2169
        %2255 = vst [vmem:[%s226 + $0x1a8] sm:$0xff] %v2170
        %2256 = vst [vmem:[%s226 + $0x1b0] sm:$0xff] %v2171
        %2257 = vst [vmem:[%s226 + $0x1b8] sm:$0xff] %v2172
        %2258 = vst [vmem:[%s226 + $0x1c0] sm:$0xff] %v2173
        %2259 = vst [vmem:[%s226 + $0x1c8] sm:$0xff] %v2174
        %2260 = vst [vmem:[%s226 + $0x1d0] sm:$0xff] %v2175
        %2261 = vst [vmem:[%s226 + $0x1d8] sm:$0xff] %v2176
        %2262 = vst [vmem:[%s226 + $0x1e0] sm:$0xff] %v2177
        %2263 = vst [vmem:[%s226 + $0x1e8] sm:$0xff] %v2178
        %2264 = vst [vmem:[%s226 + $0x1f0] sm:$0xff] %v2179
        %2265 = vst [vmem:[%s226 + $0x1f8] sm:$0xff] %v2180
        %2266 = vst [vmem:[%s226 + $0x200] sm:$0xff] %v2181
        %2267 = vst [vmem:[%s226 + $0x208] sm:$0xff] %v2182
        %2268 = vst [vmem:[%s226 + $0x210] sm:$0xff] %v2183
        %2269 = vst [vmem:[%s226 + $0x218] sm:$0xff] %v2184
        %2270 = vst [vmem:[%s226 + $0x220] sm:$0xff] %v2185
        %2271 = vst [vmem:[%s226 + $0x228] sm:$0xff] %v2186
        %2272 = vst [vmem:[%s226 + $0x230] sm:$0xff] %v2187
        %2273 = vst [vmem:[%s226 + $0x238] sm:$0xff] %v2188
        %2274 = vst [vmem:[%s226 + $0x240] sm:$0xff] %v2189
        %2275 = vst [vmem:[%s226 + $0x248] sm:$0xff] %v2190
        %2276 = vst [vmem:[%s226 + $0x250] sm:$0xff] %v2191
        %2277 = vst [vmem:[%s226 + $0x258] sm:$0xff] %v2192
        %2278 = vst [vmem:[%s226 + $0x260] sm:$0xff] %v2193
        %2279 = vst [vmem:[%s226 + $0x268] sm:$0xff] %v2194
        %2280 = vst [vmem:[%s226 + $0x270] sm:$0xff] %v2195
        %2281 = vst [vmem:[%s226 + $0x278] sm:$0xff] %v2196
        %2282 = vst [vmem:[%s226 + $0x280] sm:$0xff] %v2197
        %2283 = vst [vmem:[%s226 + $0x288] sm:$0xff] %v2198
        %2284 = vst [vmem:[%s226 + $0x290] sm:$0xff] %v2199
        %2285 = vst [vmem:[%s226 + $0x298] sm:$0xff] %v2200
        %2286 = vst [vmem:[%s226 + $0x2a0] sm:$0xff] %v2201
        %s2287 = sand.u32 %s134, 1
        %s2288 = sand.u32 %s134, 1
        %s2289 = smul.addr %s2288, 680
        %s2290 = scalar_lea.vmem [#allocation2], %s2289
        // Predicated region
        $region41: #{patch_embed.1} parent=39 // pred_check
          %p2291 = pneg %p144
        $region42: #{patch_embed.1} parent=39 // pred_check_branch
          %2293 = sbr.rel (%p2291) target = $region44
        $region43: #{patch_embed.1} parent=39 // pred_region
          %s2294 = smul.u32 85, %s16
          %s2295 = ssub.s32 169, %s2294
          %p2296 = scmp.lt.s32.totalorder %s2295, 85
          %s2297 = scalar_select %p2296, %s2295, 85
          %s2298 = smul.u32 128, %s2297
          %p2299 = scmp.ne.s32.totalorder 0, %s2298
          %s2300 = smul.addr %s2294, 8
          %s2301 = scalar_lea.vmem %s5, %s2300
          // Predicated region
          $region45: #{patch_embed.1} parent=43 // pred_check
            %p2302 = pneg %p2299
          $region46: #{patch_embed.1} parent=43 // pred_check_branch
            %2304 = sbr.rel (%p2302) target = $region48
          $region47: #{patch_embed.1} parent=43 // pred_region
            // Predicated region
            $region49: #{patch_embed.1} parent=47 // pred_check
              _
            $region50: #{patch_embed.1} parent=47 // pred_check_branch
              %2306 = sbr.rel (0) target = $region52
            $region51: #{patch_embed.1} parent=47 // pred_region
              // Predicated region
              $region71: #{patch_embed.1} parent=51 // pred_check
                _
              $region72: #{patch_embed.1} parent=51 // pred_check_branch
                %2481 = sbr.rel (0) target = $region74
              $region73: #{patch_embed.1} parent=51 // pred_region
                %s2482 = sshrl.u32 %s2297, 6
                // While loop
                $region75: #{patch_embed.1} parent=73 // loop_pre_header
                  _
                $region76: #{patch_embed.1} parent=73 // loop_header
                  %s2484 = sphi 0, %s2486
                  %p2485 = scmp.ge.s32.totalorder %s2484, %s2482
                  %s2489 = sphi 0, %s2622
                  %s2490 = sphi %s2290, %s2625
                  %s2491 = sphi %s2301, %s2626
                $region77: #{patch_embed.1} parent=73 // loop_header_branch
                  %2488 = sbr.rel (%p2485) target = $region81
                $region78: #{patch_embed.1} parent=73 // loop_body
                  %v2492 = vld [vmem:[%s2490] sm:$0xff]
                  %2493 = vst [vmem:[%s2491] sm:$0xff] %v2492
                  %v2494 = vld [vmem:[%s2490 + $0x8] sm:$0xff]
                  %2495 = vst [vmem:[%s2491 + $0x8] sm:$0xff] %v2494
                  %v2496 = vld [vmem:[%s2490 + $0x10] sm:$0xff]
                  %2497 = vst [vmem:[%s2491 + $0x10] sm:$0xff] %v2496
                  %v2498 = vld [vmem:[%s2490 + $0x18] sm:$0xff]
                  %2499 = vst [vmem:[%s2491 + $0x18] sm:$0xff] %v2498
                  %v2500 = vld [vmem:[%s2490 + $0x20] sm:$0xff]
                  %2501 = vst [vmem:[%s2491 + $0x20] sm:$0xff] %v2500
                  %v2502 = vld [vmem:[%s2490 + $0x28] sm:$0xff]
                  %2503 = vst [vmem:[%s2491 + $0x28] sm:$0xff] %v2502
                  %v2504 = vld [vmem:[%s2490 + $0x30] sm:$0xff]
                  %2505 = vst [vmem:[%s2491 + $0x30] sm:$0xff] %v2504
                  %v2506 = vld [vmem:[%s2490 + $0x38] sm:$0xff]
                  %2507 = vst [vmem:[%s2491 + $0x38] sm:$0xff] %v2506
                  %v2508 = vld [vmem:[%s2490 + $0x40] sm:$0xff]
                  %2509 = vst [vmem:[%s2491 + $0x40] sm:$0xff] %v2508
                  %v2510 = vld [vmem:[%s2490 + $0x48] sm:$0xff]
                  %2511 = vst [vmem:[%s2491 + $0x48] sm:$0xff] %v2510
                  %v2512 = vld [vmem:[%s2490 + $0x50] sm:$0xff]
                  %2513 = vst [vmem:[%s2491 + $0x50] sm:$0xff] %v2512
                  %v2514 = vld [vmem:[%s2490 + $0x58] sm:$0xff]
                  %2515 = vst [vmem:[%s2491 + $0x58] sm:$0xff] %v2514
                  %v2516 = vld [vmem:[%s2490 + $0x60] sm:$0xff]
                  %2517 = vst [vmem:[%s2491 + $0x60] sm:$0xff] %v2516
                  %v2518 = vld [vmem:[%s2490 + $0x68] sm:$0xff]
                  %2519 = vst [vmem:[%s2491 + $0x68] sm:$0xff] %v2518
                  %v2520 = vld [vmem:[%s2490 + $0x70] sm:$0xff]
                  %2521 = vst [vmem:[%s2491 + $0x70] sm:$0xff] %v2520
                  %v2522 = vld [vmem:[%s2490 + $0x78] sm:$0xff]
                  %2523 = vst [vmem:[%s2491 + $0x78] sm:$0xff] %v2522
                  %v2524 = vld [vmem:[%s2490 + $0x80] sm:$0xff]
                  %2525 = vst [vmem:[%s2491 + $0x80] sm:$0xff] %v2524
                  %v2526 = vld [vmem:[%s2490 + $0x88] sm:$0xff]
                  %2527 = vst [vmem:[%s2491 + $0x88] sm:$0xff] %v2526
                  %v2528 = vld [vmem:[%s2490 + $0x90] sm:$0xff]
                  %2529 = vst [vmem:[%s2491 + $0x90] sm:$0xff] %v2528
                  %v2530 = vld [vmem:[%s2490 + $0x98] sm:$0xff]
                  %2531 = vst [vmem:[%s2491 + $0x98] sm:$0xff] %v2530
                  %v2532 = vld [vmem:[%s2490 + $0xa0] sm:$0xff]
                  %2533 = vst [vmem:[%s2491 + $0xa0] sm:$0xff] %v2532
                  %v2534 = vld [vmem:[%s2490 + $0xa8] sm:$0xff]
                  %2535 = vst [vmem:[%s2491 + $0xa8] sm:$0xff] %v2534
                  %v2536 = vld [vmem:[%s2490 + $0xb0] sm:$0xff]
                  %2537 = vst [vmem:[%s2491 + $0xb0] sm:$0xff] %v2536
                  %v2538 = vld [vmem:[%s2490 + $0xb8] sm:$0xff]
                  %2539 = vst [vmem:[%s2491 + $0xb8] sm:$0xff] %v2538
                  %v2540 = vld [vmem:[%s2490 + $0xc0] sm:$0xff]
                  %2541 = vst [vmem:[%s2491 + $0xc0] sm:$0xff] %v2540
                  %v2542 = vld [vmem:[%s2490 + $0xc8] sm:$0xff]
                  %2543 = vst [vmem:[%s2491 + $0xc8] sm:$0xff] %v2542
                  %v2544 = vld [vmem:[%s2490 + $0xd0] sm:$0xff]
                  %2545 = vst [vmem:[%s2491 + $0xd0] sm:$0xff] %v2544
                  %v2546 = vld [vmem:[%s2490 + $0xd8] sm:$0xff]
                  %2547 = vst [vmem:[%s2491 + $0xd8] sm:$0xff] %v2546
                  %v2548 = vld [vmem:[%s2490 + $0xe0] sm:$0xff]
                  %2549 = vst [vmem:[%s2491 + $0xe0] sm:$0xff] %v2548
                  %v2550 = vld [vmem:[%s2490 + $0xe8] sm:$0xff]
                  %2551 = vst [vmem:[%s2491 + $0xe8] sm:$0xff] %v2550
                  %v2552 = vld [vmem:[%s2490 + $0xf0] sm:$0xff]
                  %2553 = vst [vmem:[%s2491 + $0xf0] sm:$0xff] %v2552
                  %v2554 = vld [vmem:[%s2490 + $0xf8] sm:$0xff]
                  %2555 = vst [vmem:[%s2491 + $0xf8] sm:$0xff] %v2554
                  %v2556 = vld [vmem:[%s2490 + $0x100] sm:$0xff]
                  %2557 = vst [vmem:[%s2491 + $0x100] sm:$0xff] %v2556
                  %v2558 = vld [vmem:[%s2490 + $0x108] sm:$0xff]
                  %2559 = vst [vmem:[%s2491 + $0x108] sm:$0xff] %v2558
                  %v2560 = vld [vmem:[%s2490 + $0x110] sm:$0xff]
                  %2561 = vst [vmem:[%s2491 + $0x110] sm:$0xff] %v2560
                  %v2562 = vld [vmem:[%s2490 + $0x118] sm:$0xff]
                  %2563 = vst [vmem:[%s2491 + $0x118] sm:$0xff] %v2562
                  %v2564 = vld [vmem:[%s2490 + $0x120] sm:$0xff]
                  %2565 = vst [vmem:[%s2491 + $0x120] sm:$0xff] %v2564
                  %v2566 = vld [vmem:[%s2490 + $0x128] sm:$0xff]
                  %2567 = vst [vmem:[%s2491 + $0x128] sm:$0xff] %v2566
                  %v2568 = vld [vmem:[%s2490 + $0x130] sm:$0xff]
                  %2569 = vst [vmem:[%s2491 + $0x130] sm:$0xff] %v2568
                  %v2570 = vld [vmem:[%s2490 + $0x138] sm:$0xff]
                  %2571 = vst [vmem:[%s2491 + $0x138] sm:$0xff] %v2570
                  %v2572 = vld [vmem:[%s2490 + $0x140] sm:$0xff]
                  %2573 = vst [vmem:[%s2491 + $0x140] sm:$0xff] %v2572
                  %v2574 = vld [vmem:[%s2490 + $0x148] sm:$0xff]
                  %2575 = vst [vmem:[%s2491 + $0x148] sm:$0xff] %v2574
                  %v2576 = vld [vmem:[%s2490 + $0x150] sm:$0xff]
                  %2577 = vst [vmem:[%s2491 + $0x150] sm:$0xff] %v2576
                  %v2578 = vld [vmem:[%s2490 + $0x158] sm:$0xff]
                  %2579 = vst [vmem:[%s2491 + $0x158] sm:$0xff] %v2578
                  %v2580 = vld [vmem:[%s2490 + $0x160] sm:$0xff]
                  %2581 = vst [vmem:[%s2491 + $0x160] sm:$0xff] %v2580
                  %v2582 = vld [vmem:[%s2490 + $0x168] sm:$0xff]
                  %2583 = vst [vmem:[%s2491 + $0x168] sm:$0xff] %v2582
                  %v2584 = vld [vmem:[%s2490 + $0x170] sm:$0xff]
                  %2585 = vst [vmem:[%s2491 + $0x170] sm:$0xff] %v2584
                  %v2586 = vld [vmem:[%s2490 + $0x178] sm:$0xff]
                  %2587 = vst [vmem:[%s2491 + $0x178] sm:$0xff] %v2586
                  %v2588 = vld [vmem:[%s2490 + $0x180] sm:$0xff]
                  %2589 = vst [vmem:[%s2491 + $0x180] sm:$0xff] %v2588
                  %v2590 = vld [vmem:[%s2490 + $0x188] sm:$0xff]
                  %2591 = vst [vmem:[%s2491 + $0x188] sm:$0xff] %v2590
                  %v2592 = vld [vmem:[%s2490 + $0x190] sm:$0xff]
                  %2593 = vst [vmem:[%s2491 + $0x190] sm:$0xff] %v2592
                  %v2594 = vld [vmem:[%s2490 + $0x198] sm:$0xff]
                  %2595 = vst [vmem:[%s2491 + $0x198] sm:$0xff] %v2594
                  %v2596 = vld [vmem:[%s2490 + $0x1a0] sm:$0xff]
                  %2597 = vst [vmem:[%s2491 + $0x1a0] sm:$0xff] %v2596
                  %v2598 = vld [vmem:[%s2490 + $0x1a8] sm:$0xff]
                  %2599 = vst [vmem:[%s2491 + $0x1a8] sm:$0xff] %v2598
                  %v2600 = vld [vmem:[%s2490 + $0x1b0] sm:$0xff]
                  %2601 = vst [vmem:[%s2491 + $0x1b0] sm:$0xff] %v2600
                  %v2602 = vld [vmem:[%s2490 + $0x1b8] sm:$0xff]
                  %2603 = vst [vmem:[%s2491 + $0x1b8] sm:$0xff] %v2602
                  %v2604 = vld [vmem:[%s2490 + $0x1c0] sm:$0xff]
                  %2605 = vst [vmem:[%s2491 + $0x1c0] sm:$0xff] %v2604
                  %v2606 = vld [vmem:[%s2490 + $0x1c8] sm:$0xff]
                  %2607 = vst [vmem:[%s2491 + $0x1c8] sm:$0xff] %v2606
                  %v2608 = vld [vmem:[%s2490 + $0x1d0] sm:$0xff]
                  %2609 = vst [vmem:[%s2491 + $0x1d0] sm:$0xff] %v2608
                  %v2610 = vld [vmem:[%s2490 + $0x1d8] sm:$0xff]
                  %2611 = vst [vmem:[%s2491 + $0x1d8] sm:$0xff] %v2610
                  %v2612 = vld [vmem:[%s2490 + $0x1e0] sm:$0xff]
                  %2613 = vst [vmem:[%s2491 + $0x1e0] sm:$0xff] %v2612
                  %v2614 = vld [vmem:[%s2490 + $0x1e8] sm:$0xff]
                  %2615 = vst [vmem:[%s2491 + $0x1e8] sm:$0xff] %v2614
                  %v2616 = vld [vmem:[%s2490 + $0x1f0] sm:$0xff]
                  %2617 = vst [vmem:[%s2491 + $0x1f0] sm:$0xff] %v2616
                  %v2618 = vld [vmem:[%s2490 + $0x1f8] sm:$0xff]
                  %2619 = vst [vmem:[%s2491 + $0x1f8] sm:$0xff] %v2618
                  %s2620 = sadd.s32 1, %s2489
                  %p2621 = scmp.ge.s32.totalorder %s2620, %s2482
                  %s2622 = scalar_select %p2621, 0, %s2620
                  %s2623 = smul.u32 %s2622, 512
                  %s2624 = smul.u32 %s2622, 512
                  %s2625 = scalar_lea.vmem %s2290, %s2623 [#allocation2]
                  %s2626 = scalar_lea.vmem %s2301, %s2624
                $region79: #{patch_embed.1} parent=73 // loop_footer
                  %s2486 = sadd.s32 %s2484, 1
                $region80: #{patch_embed.1} parent=73 // loop_footer_branch
                  %2483 = sbr.rel target = $region76
                $region81: #{patch_embed.1} parent=73 // loop_exit
                  _
                %s2627 = sshrl.u32 %s2297, 6
                %s2628 = sand.u32 %s2297, 63
                %s2629 = smul.u32 %s2627, 64
                %s2630 = smul.u32 8, %s2629
                %s2631 = scalar_lea.vmem %s2290, %s2630 [#allocation2]
                %s2632 = smul.u32 8, %s2629
                %s2633 = scalar_lea.vmem %s2301, %s2632
                // While loop
                $region82: #{patch_embed.1} parent=73 // loop_pre_header
                  _
                $region83: #{patch_embed.1} parent=73 // loop_header
                  %s2635 = sphi 0, %s2637
                  %p2636 = scmp.ge.s32.totalorder %s2635, %s2628
                  %s2640 = sphi 0, %s2647
                  %s2641 = sphi %s2631, %s2650
                  %s2642 = sphi %s2633, %s2651
                $region84: #{patch_embed.1} parent=73 // loop_header_branch
                  %2639 = sbr.rel (%p2636) target = $region88
                $region85: #{patch_embed.1} parent=73 // loop_body
                  %v2643 = vld [vmem:[%s2641] sm:$0xff]
                  %2644 = vst [vmem:[%s2642] sm:$0xff] %v2643
                  %s2645 = sadd.s32 1, %s2640
                  %p2646 = scmp.ge.s32.totalorder %s2645, %s2628
                  %s2647 = scalar_select %p2646, 0, %s2645
                  %s2648 = smul.u32 %s2647, 8
                  %s2649 = smul.u32 %s2647, 8
                  %s2650 = scalar_lea.vmem %s2631, %s2648 [#allocation2]
                  %s2651 = scalar_lea.vmem %s2633, %s2649
                $region86: #{patch_embed.1} parent=73 // loop_footer
                  %s2637 = sadd.s32 %s2635, 1
                $region87: #{patch_embed.1} parent=73 // loop_footer_branch
                  %2634 = sbr.rel target = $region83
                $region88: #{patch_embed.1} parent=73 // loop_exit
                  _
              $region74: #{patch_embed.1} parent=51 // pred_fallthru
                _
              // Predicated region
              $region89: #{patch_embed.1} parent=51 // pred_check
                _
              $region90: #{patch_embed.1} parent=51 // pred_check_branch
                %2653 = sbr.rel target = $region92
              $region91: #{patch_embed.1} parent=51 // pred_region
                _
              $region92: #{patch_embed.1} parent=51 // pred_fallthru
                _
            $region52: #{patch_embed.1} parent=47 // pred_fallthru
              _
            // Predicated region
            $region53: #{patch_embed.1} parent=47 // pred_check
              _
            $region54: #{patch_embed.1} parent=47 // pred_check_branch
              %2308 = sbr.rel target = $region56
            $region55: #{patch_embed.1} parent=47 // pred_region
              %s2310 = sshrl.u32 %s2297, 6
              // While loop
              $region57: #{patch_embed.1} parent=55 // loop_pre_header
                _
              $region58: #{patch_embed.1} parent=55 // loop_header
                %s2312 = sphi 0, %s2314
                %p2313 = scmp.ge.s32.totalorder %s2312, %s2310
                %s2317 = sphi 0, %s2450
                %s2318 = sphi %s2290, %s2453
                %s2319 = sphi %s2301, %s2454
              $region59: #{patch_embed.1} parent=55 // loop_header_branch
                %2316 = sbr.rel (%p2313) target = $region63
              $region60: #{patch_embed.1} parent=55 // loop_body
                %v2320 = vld [vmem:[%s2318] sm:$0xff]
                %2321 = vst [vmem:[%s2319] sm:$0xff] %v2320
                %v2322 = vld [vmem:[%s2318 + $0x8] sm:$0xff]
                %2323 = vst [vmem:[%s2319 + $0x8] sm:$0xff] %v2322
                %v2324 = vld [vmem:[%s2318 + $0x10] sm:$0xff]
                %2325 = vst [vmem:[%s2319 + $0x10] sm:$0xff] %v2324
                %v2326 = vld [vmem:[%s2318 + $0x18] sm:$0xff]
                %2327 = vst [vmem:[%s2319 + $0x18] sm:$0xff] %v2326
                %v2328 = vld [vmem:[%s2318 + $0x20] sm:$0xff]
                %2329 = vst [vmem:[%s2319 + $0x20] sm:$0xff] %v2328
                %v2330 = vld [vmem:[%s2318 + $0x28] sm:$0xff]
                %2331 = vst [vmem:[%s2319 + $0x28] sm:$0xff] %v2330
                %v2332 = vld [vmem:[%s2318 + $0x30] sm:$0xff]
                %2333 = vst [vmem:[%s2319 + $0x30] sm:$0xff] %v2332
                %v2334 = vld [vmem:[%s2318 + $0x38] sm:$0xff]
                %2335 = vst [vmem:[%s2319 + $0x38] sm:$0xff] %v2334
                %v2336 = vld [vmem:[%s2318 + $0x40] sm:$0xff]
                %2337 = vst [vmem:[%s2319 + $0x40] sm:$0xff] %v2336
                %v2338 = vld [vmem:[%s2318 + $0x48] sm:$0xff]
                %2339 = vst [vmem:[%s2319 + $0x48] sm:$0xff] %v2338
                %v2340 = vld [vmem:[%s2318 + $0x50] sm:$0xff]
                %2341 = vst [vmem:[%s2319 + $0x50] sm:$0xff] %v2340
                %v2342 = vld [vmem:[%s2318 + $0x58] sm:$0xff]
                %2343 = vst [vmem:[%s2319 + $0x58] sm:$0xff] %v2342
                %v2344 = vld [vmem:[%s2318 + $0x60] sm:$0xff]
                %2345 = vst [vmem:[%s2319 + $0x60] sm:$0xff] %v2344
                %v2346 = vld [vmem:[%s2318 + $0x68] sm:$0xff]
                %2347 = vst [vmem:[%s2319 + $0x68] sm:$0xff] %v2346
                %v2348 = vld [vmem:[%s2318 + $0x70] sm:$0xff]
                %2349 = vst [vmem:[%s2319 + $0x70] sm:$0xff] %v2348
                %v2350 = vld [vmem:[%s2318 + $0x78] sm:$0xff]
                %2351 = vst [vmem:[%s2319 + $0x78] sm:$0xff] %v2350
                %v2352 = vld [vmem:[%s2318 + $0x80] sm:$0xff]
                %2353 = vst [vmem:[%s2319 + $0x80] sm:$0xff] %v2352
                %v2354 = vld [vmem:[%s2318 + $0x88] sm:$0xff]
                %2355 = vst [vmem:[%s2319 + $0x88] sm:$0xff] %v2354
                %v2356 = vld [vmem:[%s2318 + $0x90] sm:$0xff]
                %2357 = vst [vmem:[%s2319 + $0x90] sm:$0xff] %v2356
                %v2358 = vld [vmem:[%s2318 + $0x98] sm:$0xff]
                %2359 = vst [vmem:[%s2319 + $0x98] sm:$0xff] %v2358
                %v2360 = vld [vmem:[%s2318 + $0xa0] sm:$0xff]
                %2361 = vst [vmem:[%s2319 + $0xa0] sm:$0xff] %v2360
                %v2362 = vld [vmem:[%s2318 + $0xa8] sm:$0xff]
                %2363 = vst [vmem:[%s2319 + $0xa8] sm:$0xff] %v2362
                %v2364 = vld [vmem:[%s2318 + $0xb0] sm:$0xff]
                %2365 = vst [vmem:[%s2319 + $0xb0] sm:$0xff] %v2364
                %v2366 = vld [vmem:[%s2318 + $0xb8] sm:$0xff]
                %2367 = vst [vmem:[%s2319 + $0xb8] sm:$0xff] %v2366
                %v2368 = vld [vmem:[%s2318 + $0xc0] sm:$0xff]
                %2369 = vst [vmem:[%s2319 + $0xc0] sm:$0xff] %v2368
                %v2370 = vld [vmem:[%s2318 + $0xc8] sm:$0xff]
                %2371 = vst [vmem:[%s2319 + $0xc8] sm:$0xff] %v2370
                %v2372 = vld [vmem:[%s2318 + $0xd0] sm:$0xff]
                %2373 = vst [vmem:[%s2319 + $0xd0] sm:$0xff] %v2372
                %v2374 = vld [vmem:[%s2318 + $0xd8] sm:$0xff]
                %2375 = vst [vmem:[%s2319 + $0xd8] sm:$0xff] %v2374
                %v2376 = vld [vmem:[%s2318 + $0xe0] sm:$0xff]
                %2377 = vst [vmem:[%s2319 + $0xe0] sm:$0xff] %v2376
                %v2378 = vld [vmem:[%s2318 + $0xe8] sm:$0xff]
                %2379 = vst [vmem:[%s2319 + $0xe8] sm:$0xff] %v2378
                %v2380 = vld [vmem:[%s2318 + $0xf0] sm:$0xff]
                %2381 = vst [vmem:[%s2319 + $0xf0] sm:$0xff] %v2380
                %v2382 = vld [vmem:[%s2318 + $0xf8] sm:$0xff]
                %2383 = vst [vmem:[%s2319 + $0xf8] sm:$0xff] %v2382
                %v2384 = vld [vmem:[%s2318 + $0x100] sm:$0xff]
                %2385 = vst [vmem:[%s2319 + $0x100] sm:$0xff] %v2384
                %v2386 = vld [vmem:[%s2318 + $0x108] sm:$0xff]
                %2387 = vst [vmem:[%s2319 + $0x108] sm:$0xff] %v2386
                %v2388 = vld [vmem:[%s2318 + $0x110] sm:$0xff]
                %2389 = vst [vmem:[%s2319 + $0x110] sm:$0xff] %v2388
                %v2390 = vld [vmem:[%s2318 + $0x118] sm:$0xff]
                %2391 = vst [vmem:[%s2319 + $0x118] sm:$0xff] %v2390
                %v2392 = vld [vmem:[%s2318 + $0x120] sm:$0xff]
                %2393 = vst [vmem:[%s2319 + $0x120] sm:$0xff] %v2392
                %v2394 = vld [vmem:[%s2318 + $0x128] sm:$0xff]
                %2395 = vst [vmem:[%s2319 + $0x128] sm:$0xff] %v2394
                %v2396 = vld [vmem:[%s2318 + $0x130] sm:$0xff]
                %2397 = vst [vmem:[%s2319 + $0x130] sm:$0xff] %v2396
                %v2398 = vld [vmem:[%s2318 + $0x138] sm:$0xff]
                %2399 = vst [vmem:[%s2319 + $0x138] sm:$0xff] %v2398
                %v2400 = vld [vmem:[%s2318 + $0x140] sm:$0xff]
                %2401 = vst [vmem:[%s2319 + $0x140] sm:$0xff] %v2400
                %v2402 = vld [vmem:[%s2318 + $0x148] sm:$0xff]
                %2403 = vst [vmem:[%s2319 + $0x148] sm:$0xff] %v2402
                %v2404 = vld [vmem:[%s2318 + $0x150] sm:$0xff]
                %2405 = vst [vmem:[%s2319 + $0x150] sm:$0xff] %v2404
                %v2406 = vld [vmem:[%s2318 + $0x158] sm:$0xff]
                %2407 = vst [vmem:[%s2319 + $0x158] sm:$0xff] %v2406
                %v2408 = vld [vmem:[%s2318 + $0x160] sm:$0xff]
                %2409 = vst [vmem:[%s2319 + $0x160] sm:$0xff] %v2408
                %v2410 = vld [vmem:[%s2318 + $0x168] sm:$0xff]
                %2411 = vst [vmem:[%s2319 + $0x168] sm:$0xff] %v2410
                %v2412 = vld [vmem:[%s2318 + $0x170] sm:$0xff]
                %2413 = vst [vmem:[%s2319 + $0x170] sm:$0xff] %v2412
                %v2414 = vld [vmem:[%s2318 + $0x178] sm:$0xff]
                %2415 = vst [vmem:[%s2319 + $0x178] sm:$0xff] %v2414
                %v2416 = vld [vmem:[%s2318 + $0x180] sm:$0xff]
                %2417 = vst [vmem:[%s2319 + $0x180] sm:$0xff] %v2416
                %v2418 = vld [vmem:[%s2318 + $0x188] sm:$0xff]
                %2419 = vst [vmem:[%s2319 + $0x188] sm:$0xff] %v2418
                %v2420 = vld [vmem:[%s2318 + $0x190] sm:$0xff]
                %2421 = vst [vmem:[%s2319 + $0x190] sm:$0xff] %v2420
                %v2422 = vld [vmem:[%s2318 + $0x198] sm:$0xff]
                %2423 = vst [vmem:[%s2319 + $0x198] sm:$0xff] %v2422
                %v2424 = vld [vmem:[%s2318 + $0x1a0] sm:$0xff]
                %2425 = vst [vmem:[%s2319 + $0x1a0] sm:$0xff] %v2424
                %v2426 = vld [vmem:[%s2318 + $0x1a8] sm:$0xff]
                %2427 = vst [vmem:[%s2319 + $0x1a8] sm:$0xff] %v2426
                %v2428 = vld [vmem:[%s2318 + $0x1b0] sm:$0xff]
                %2429 = vst [vmem:[%s2319 + $0x1b0] sm:$0xff] %v2428
                %v2430 = vld [vmem:[%s2318 + $0x1b8] sm:$0xff]
                %2431 = vst [vmem:[%s2319 + $0x1b8] sm:$0xff] %v2430
                %v2432 = vld [vmem:[%s2318 + $0x1c0] sm:$0xff]
                %2433 = vst [vmem:[%s2319 + $0x1c0] sm:$0xff] %v2432
                %v2434 = vld [vmem:[%s2318 + $0x1c8] sm:$0xff]
                %2435 = vst [vmem:[%s2319 + $0x1c8] sm:$0xff] %v2434
                %v2436 = vld [vmem:[%s2318 + $0x1d0] sm:$0xff]
                %2437 = vst [vmem:[%s2319 + $0x1d0] sm:$0xff] %v2436
                %v2438 = vld [vmem:[%s2318 + $0x1d8] sm:$0xff]
                %2439 = vst [vmem:[%s2319 + $0x1d8] sm:$0xff] %v2438
                %v2440 = vld [vmem:[%s2318 + $0x1e0] sm:$0xff]
                %2441 = vst [vmem:[%s2319 + $0x1e0] sm:$0xff] %v2440
                %v2442 = vld [vmem:[%s2318 + $0x1e8] sm:$0xff]
                %2443 = vst [vmem:[%s2319 + $0x1e8] sm:$0xff] %v2442
                %v2444 = vld [vmem:[%s2318 + $0x1f0] sm:$0xff]
                %2445 = vst [vmem:[%s2319 + $0x1f0] sm:$0xff] %v2444
                %v2446 = vld [vmem:[%s2318 + $0x1f8] sm:$0xff]
                %2447 = vst [vmem:[%s2319 + $0x1f8] sm:$0xff] %v2446
                %s2448 = sadd.s32 1, %s2317
                %p2449 = scmp.ge.s32.totalorder %s2448, %s2310
                %s2450 = scalar_select %p2449, 0, %s2448
                %s2451 = smul.u32 %s2450, 512
                %s2452 = smul.u32 %s2450, 512
                %s2453 = scalar_lea.vmem %s2290, %s2451 [#allocation2]
                %s2454 = scalar_lea.vmem %s2301, %s2452
              $region61: #{patch_embed.1} parent=55 // loop_footer
                %s2314 = sadd.s32 %s2312, 1
              $region62: #{patch_embed.1} parent=55 // loop_footer_branch
                %2311 = sbr.rel target = $region58
              $region63: #{patch_embed.1} parent=55 // loop_exit
                _
              %s2455 = sshrl.u32 %s2297, 6
              %s2456 = sand.u32 %s2297, 63
              %s2457 = smul.u32 %s2455, 64
              %s2458 = smul.u32 8, %s2457
              %s2459 = scalar_lea.vmem %s2290, %s2458 [#allocation2]
              %s2460 = smul.u32 8, %s2457
              %s2461 = scalar_lea.vmem %s2301, %s2460
              // While loop
              $region64: #{patch_embed.1} parent=55 // loop_pre_header
                _
              $region65: #{patch_embed.1} parent=55 // loop_header
                %s2463 = sphi 0, %s2465
                %p2464 = scmp.ge.s32.totalorder %s2463, %s2456
                %s2468 = sphi 0, %s2475
                %s2469 = sphi %s2459, %s2478
                %s2470 = sphi %s2461, %s2479
              $region66: #{patch_embed.1} parent=55 // loop_header_branch
                %2467 = sbr.rel (%p2464) target = $region70
              $region67: #{patch_embed.1} parent=55 // loop_body
                %v2471 = vld [vmem:[%s2469] sm:$0xff]
                %2472 = vst [vmem:[%s2470] sm:$0xff] %v2471
                %s2473 = sadd.s32 1, %s2468
                %p2474 = scmp.ge.s32.totalorder %s2473, %s2456
                %s2475 = scalar_select %p2474, 0, %s2473
                %s2476 = smul.u32 %s2475, 8
                %s2477 = smul.u32 %s2475, 8
                %s2478 = scalar_lea.vmem %s2459, %s2476 [#allocation2]
                %s2479 = scalar_lea.vmem %s2461, %s2477
              $region68: #{patch_embed.1} parent=55 // loop_footer
                %s2465 = sadd.s32 %s2463, 1
              $region69: #{patch_embed.1} parent=55 // loop_footer_branch
                %2462 = sbr.rel target = $region65
              $region70: #{patch_embed.1} parent=55 // loop_exit
                _
            $region56: #{patch_embed.1} parent=47 // pred_fallthru
              _
          $region48: #{patch_embed.1} parent=43 // pred_fallthru
            _
          %2654 = vnop
        $region44: #{patch_embed.1} parent=39 // pred_fallthru
          _
      $region40: #{patch_embed.1} parent=5 // pred_fallthru
        _
      %p2655 = scmp.le.s32.totalorder 2, %s11
      // Predicated region
      $region93: #{patch_embed.1} parent=5 // pred_check
        %p2656 = pneg %p2655
      $region94: #{patch_embed.1} parent=5 // pred_check_branch
        %2658 = sbr.rel (%p2656) target = $region96
      $region95: #{patch_embed.1} parent=5 // pred_region
        %s2659 = ssub.s32 %s11, 2
        // Predicated region
        $region97: #{patch_embed.1} parent=95 // pred_check
          %p2660 = pneg %p150
        $region98: #{patch_embed.1} parent=95 // pred_check_branch
          %2662 = sbr.rel (%p2660) target = $region100
        $region99: #{patch_embed.1} parent=95 // pred_region
          %s2663 = sand.u32 %s135, 1
          %s2664 = sand.u32 %s135, 1
          %s2665 = smul.addr %s2664, 680
          %s2666 = scalar_lea.vmem [#allocation2], %s2665
        $region100: #{patch_embed.1} parent=95 // pred_fallthru
          _
      $region96: #{patch_embed.1} parent=5 // pred_fallthru
        _
    $region6: #{patch_embed.1} parent=1 // loop_footer
      %s15 = sadd.s32 1, %s11
    $region7: #{patch_embed.1} parent=1 // loop_footer_branch
      %10 = sbr.rel target = $region3
    $region8: #{patch_embed.1} parent=1 // loop_exit
      _

</llo_original>
